<compile_context>
chip_gen: v7x
topology: tpu7x:2x2x1
jax: 0.10.0
libtpu: 0.0.40
codegen_flags: <defaults>
</compile_context>

<pallas_src>
import functools

import numpy as np
import jax
import jax.numpy as jnp
from jax.experimental import pallas as pl
from jax.experimental.pallas import tpu as pltpu

BF16 = jnp.bfloat16


# ------------------------------- fused kernel --------------------------------
def _cnn_kernel(x_ref, w1_ref, b1_ref, w2_ref, b2_ref,
                wf1_ref, bf1_ref, wf2_ref, bf2_ref, wf3_ref, bf3_ref,
                o_ref):
    """Full forward pass for B_TILE images, entirely on VMEM-resident values.

    x_ref  : (26*Bt, 3*Cin*28) bf16 rows-only im2col slab; row = g*Bt + b where the
             26 conv-output rows are grouped as [4j | 4j+1 | 4j+2 | 4j+3]
             (7,7,6,6 rows); lane = dy*Cin*28 + ci*28 + x.
    w1_ref : (3*Cin*28, 512)   conv1 Toeplitz; out lane = p*256 + co*13 + j (ox = 2j+p)
    w2_ref : (3, 208, 256)     conv2 row-Toeplitz; in lane = ci*13 + x,
                               out lane = p*128 + co*5 + m (ox = 2m+p)
    wf1_ref: (5, 80, 128)      fc1 split per pooled row y (input lane = co*5 + x)
    wf2_ref, wf3_ref : (128, 128) zero-padded fc2 / fc3 weights
    b*_ref : f32 bias rows (fc3 padded lanes are -1e30 so softmax ignores them)
    o_ref  : (Bt, 128) softmax probabilities (valid lanes [0, n_classes))
    """
    B = o_ref.shape[0]                       # images per grid step (static)
    dot = functools.partial(jnp.dot, preferred_element_type=jnp.float32)

    def pool_bias_relu(rows_a, rows_b, half, width, b_ref):
        m = jnp.maximum(rows_a, rows_b)                          # max over the 2 y rows
        m = jnp.maximum(m[:, :width], m[:, half:half + width])   # max over the 2 x cols
        return jnp.maximum(m + b_ref[...], 0.0)                  # bias + ReLU in f32

    # ---- conv1: single MXU matmul over all 26 conv rows of all B images ----
    a = dot(x_ref[...], w1_ref[...])                          # (26B, 512) f32
    p1e = pool_bias_relu(a[0:7 * B], a[7 * B:14 * B], 256, 208, b1_ref)     # (7B, 208)
    p1o = pool_bias_relu(a[14 * B:20 * B], a[20 * B:26 * B], 256, 208, b1_ref)  # (6B,208)

    # ---- conv2 (+ReLU+pool): casts hoisted, contiguous sublane slices only ----
    p1e_b = p1e.astype(BF16)
    p1o_b = p1o.astype(BF16)
    w2 = [w2_ref[d] for d in range(3)]
    c2e = (dot(p1e_b[0:5 * B], w2[0]) + dot(p1o_b[0:5 * B], w2[1])
           + dot(p1e_b[B:6 * B], w2[2]))                      # (5B, 256) conv2 rows 2m
    c2o = (dot(p1o_b[0:5 * B], w2[0]) + dot(p1e_b[B:6 * B], w2[1])
           + dot(p1o_b[B:6 * B], w2[2]))                      # (5B, 256) conv2 rows 2m+1
    p2 = pool_bias_relu(c2e, c2o, 128, 80, b2_ref)            # (5B, 80): lane = co*5 + x

    # ---- fc1 as a sum over the 5 pooled rows (M = B_TILE per dot) ----
    p2_b = p2.astype(BF16)
    h = dot(p2_b[0:B], wf1_ref[0])
    for y in range(1, 5):
        h = h + dot(p2_b[y * B:(y + 1) * B], wf1_ref[y])
    h1 = jnp.maximum(h + bf1_ref[...], 0.0)                   # (B, 128)
    h2 = jnp.maximum(dot(h1.astype(BF16), wf2_ref[...]) + bf2_ref[...], 0.0)
    logits = dot(h2.astype(BF16), wf3_ref[...]) + bf3_ref[...]  # padded lanes -> -1e30

    mx = jnp.max(logits, axis=-1, keepdims=True)
    e = jnp.exp(logits - mx)
    o_ref[...] = (e / jnp.sum(e, axis=-1, keepdims=True)).astype(o_ref.dtype)


# ------------------------------ pallas wrapper --------------------------------
@functools.partial(jax.jit, static_argnames=("n_classes", "b_tile"))
def cnn_forward(x_nchw, prep, *, n_classes, b_tile=64):
    """Forward pass. x: (B, Cin, 28, 28) float32 NCHW (28x28 required by fc1)."""
    B, Cin, H, W = x_nchw.shape
    assert (H, W) == (28, 28), "fc1 = Linear(16*5*5, .) requires 28x28 inputs"
    assert b_tile % 8 == 0, "b_tile must be a multiple of 8 for sublane alignment"
    K1 = Cin * 28
    nsteps = -(-B // b_tile)
    Bp = nsteps * b_tile
    if Bp != B:
        x_nchw = jnp.pad(x_nchw, ((0, Bp - B), (0, 0), (0, 0), (0, 0)))

    # rows-only im2col in bf16: lhs[b, r, dy*K1 + ci*28 + x] = x[b, ci, r+dy, x]
    xr = x_nchw.astype(BF16).transpose(0, 2, 1, 3).reshape(Bp, 28, K1)
    lhs = jnp.concatenate([xr[:, 0:26], xr[:, 1:27], xr[:, 2:28]], axis=-1)  # (Bp,26,3K1)

    # reorder the 26 conv-output rows into pool-parity groups:
    #   [0,7B): rows 4j   [7B,14B): rows 4j+1   [14B,20B): rows 4j+2   [20B,26B): 4j+3
    row_order = ([4 * j for j in range(7)] + [4 * j + 1 for j in range(7)]
                 + [4 * j + 2 for j in range(6)] + [4 * j + 3 for j in range(6)])
    lhs = lhs[:, jnp.asarray(row_order), :]

    # per-tile slab with row index = group_row * b_tile + image (contiguous slices only)
    slab = (lhs.reshape(nsteps, b_tile, 26, 3 * K1)
               .transpose(0, 2, 1, 3)
               .reshape(nsteps * 26 * b_tile, 3 * K1))

    def const_spec(shape):
        zeros = (0,) * len(shape)
        return pl.BlockSpec(shape, lambda i, _z=zeros: _z)

    in_specs = [
        pl.BlockSpec((26 * b_tile, 3 * K1), lambda i: (i, 0)),
        const_spec((3 * K1, 512)), const_spec((1, 208)),
        const_spec((3, 208, 256)), const_spec((1, 80)),
        const_spec((5, 80, 128)), const_spec((1, 128)),
        const_spec((128, 128)), const_spec((1, 128)),
        const_spec((128, 128)), const_spec((1, 128)),
    ]
    out = pl.pallas_call(
        _cnn_kernel,
        out_shape=jax.ShapeDtypeStruct((Bp, 128), jnp.float32),
        grid=(nsteps,),
        in_specs=in_specs,
        out_specs=pl.BlockSpec((b_tile, 128), lambda i: (i, 0)),
        compiler_params=pltpu.CompilerParams(
            dimension_semantics=("parallel",),
            vmem_limit_bytes=32 * 1024 * 1024),
    )(slab, prep["w1"], prep["b1"], prep["w2"], prep["b2"],
      prep["wf1"], prep["bf1"], prep["wf2"], prep["bf2"],
      prep["wf3"], prep["bf3"])
    return out[:B, :n_classes]


# ----------------------- one-time host-side weight prep -----------------------
def prepare_params(raw):
    """Build the Toeplitz / padded matrices the kernel consumes (runs once, host-side)."""
    w1 = np.asarray(raw["conv1_w"], np.float32)   # (16, Cin, 3, 3)  torch layout
    b1 = np.asarray(raw["conv1_b"], np.float32)
    w2 = np.asarray(raw["conv2_w"], np.float32)   # (16, 16, 3, 3)
    b2 = np.asarray(raw["conv2_b"], np.float32)
    f1w = np.asarray(raw["fc1_w"], np.float32)    # (120, 400)
    f1b = np.asarray(raw["fc1_b"], np.float32)
    f2w = np.asarray(raw["fc2_w"], np.float32)    # (84, 120)
    f2b = np.asarray(raw["fc2_b"], np.float32)
    f3w = np.asarray(raw["fc3_w"], np.float32)    # (n_classes, 84)
    f3b = np.asarray(raw["fc3_b"], np.float32)
    cin = w1.shape[1]
    n_classes = f3w.shape[0]
    assert n_classes <= 128

    # conv1 Toeplitz with dy folded into the K dim:
    #   in lane = dy*cin*28 + ci*28 + xin, out lane = p*256 + co*13 + j (output x = 2j+p)
    W1 = np.zeros((3, cin * 28, 512), np.float32)
    for dy in range(3):
        for dx in range(3):
            for p in range(2):
                for j in range(13):
                    rows = np.arange(cin) * 28 + (2 * j + p + dx)
                    cols = p * 256 + np.arange(16) * 13 + j
                    W1[dy][np.ix_(rows, cols)] = w1[:, :, dy, dx].T
    W1 = W1.reshape(3 * cin * 28, 512)
    B1 = np.repeat(b1, 13).reshape(1, 208)        # lane = co*13 + j

    # conv2 row-Toeplitz: in lane = ci*13 + x, out lane = p*128 + co*5 + m (x = 2m + p).
    W2 = np.zeros((3, 208, 256), np.float32)
    for dy in range(3):
        for dx in range(3):
            for p in range(2):
                for m in range(5):
                    rows = np.arange(16) * 13 + (2 * m + p + dx)
                    cols = p * 128 + np.arange(16) * 5 + m
                    W2[dy][np.ix_(rows, cols)] = w2[:, :, dy, dx].T
    B2 = np.repeat(b2, 5).reshape(1, 80)          # lane = co*5 + m

    # fc1 split per pooled row y: WF1[y, co*5 + x, n] = f1w[n, co*25 + y*5 + x]
    WF1 = np.zeros((5, 80, 128), np.float32)
    WF1[:, :, :120] = f1w.reshape(120, 16, 5, 5).transpose(2, 1, 3, 0).reshape(5, 80, 120)
    BF1 = np.zeros((1, 128), np.float32); BF1[0, :120] = f1b
    WF2 = np.zeros((128, 128), np.float32); WF2[:120, :84] = f2w.T
    BF2 = np.zeros((1, 128), np.float32); BF2[0, :84] = f2b
    WF3 = np.zeros((128, 128), np.float32); WF3[:84, :n_classes] = f3w.T
    BF3 = np.full((1, 128), -1e30, np.float32); BF3[0, :n_classes] = f3b

    asbf = lambda a: jnp.asarray(a, BF16)
    asf32 = lambda a: jnp.asarray(a, jnp.float32)
    return dict(w1=asbf(W1), b1=asf32(B1), w2=asbf(W2), b2=asf32(B2),
                wf1=asbf(WF1), bf1=asf32(BF1), wf2=asbf(WF2), bf2=asf32(BF2),
                wf3=asbf(WF3), bf3=asf32(BF3))


# ------------------------- deterministic torch-layout init --------------------
def init_raw_params(key, input_channels, output_size):
    ks = jax.random.split(key, 10)

    def u(k, shape, fan_in):
        bound = 1.0 / np.sqrt(fan_in)
        return jax.random.uniform(k, shape, jnp.float32, -bound, bound)

    return dict(
        conv1_w=u(ks[0], (16, input_channels, 3, 3), 9 * input_channels),
        conv1_b=u(ks[1], (16,), 9 * input_channels),
        conv2_w=u(ks[2], (16, 16, 3, 3), 9 * 16),
        conv2_b=u(ks[3], (16,), 9 * 16),
        fc1_w=u(ks[4], (120, 16 * 5 * 5), 16 * 5 * 5),
        fc1_b=u(ks[5], (120,), 16 * 5 * 5),
        fc2_w=u(ks[6], (84, 120), 120),
        fc2_b=u(ks[7], (84,), 120),
        fc3_w=u(ks[8], (output_size, 84), 84),
        fc3_b=u(ks[9], (output_size,), 84),
    )


# ----------------------------- pure-JAX reference -----------------------------
def cnn_reference(x, raw):
    def conv(t, w, b):
        y = jax.lax.conv_general_dilated(t, w, (1, 1), "VALID",
                                         dimension_numbers=("NCHW", "OIHW", "NCHW"))
        return y + b[None, :, None, None]

    def pool(t):
        b_, c_, h_, w_ = t.shape
        t = t[:, :, :(h_ // 2) * 2, :(w_ // 2) * 2]
        return t.reshape(b_, c_, h_ // 2, 2, w_ // 2, 2).max(axis=(3, 5))

    h = pool(jax.nn.relu(conv(x, raw["conv1_w"], raw["conv1_b"])))
    h = pool(jax.nn.relu(conv(h, raw["conv2_w"], raw["conv2_b"])))
    h = h.reshape(h.shape[0], -1)                               # (C, H, W) flatten order
    h = jax.nn.relu(h @ raw["fc1_w"].T + raw["fc1_b"])
    h = jax.nn.relu(h @ raw["fc2_w"].T + raw["fc2_b"])
    logits = h @ raw["fc3_w"].T + raw["fc3_b"]
    return jax.nn.softmax(logits, axis=-1)


if __name__ == "__main__":
    key = jax.random.PRNGKey(0)
    kx, kp = jax.random.split(key)

    # 28x28 is required by fc1 = Linear(16*5*5, 120): 28 -> 26 -> 13 -> 11 -> 5.
    # b_tile=8 keeps the demo small with a grid of 2; use 32-64 (v7x) / 128+ (v5e/v6e)
    # for real batches.
    batch, input_channels, output_size, b_tile = 16, 1, 10, 8
    x = jax.random.normal(kx, (batch, input_channels, 28, 28), jnp.float32)

    raw = init_raw_params(kp, input_channels, output_size)
    prep = prepare_params(raw)

    out = cnn_forward(x, prep, n_classes=output_size, b_tile=b_tile)
    out = jax.block_until_ready(out)

    assert out.shape == (batch, output_size)
    assert bool(jnp.all(jnp.isfinite(out)))
    # softmax rows sum to 1 (padded logits are biased to -1e30, so they contribute 0)
    assert bool(jnp.all(jnp.abs(jnp.sum(out, axis=-1) - 1.0) < 1e-4))
    # bf16 matmul operands -> allow a loose tolerance vs. the f32 reference
    ref = jax.block_until_ready(cnn_reference(x, raw))
    assert float(jnp.max(jnp.abs(out - ref))) < 5e-2
    print("KERNEL_OK")
</pallas_src>

<mosaic_0001>
module attributes {stable_mosaic.version = 11 : i64} {
  func.func @_cnn_kernel(%arg0: i32, %arg1: memref<208x84xbf16, #tpu.memory_space<vmem>>, %arg2: memref<84x512xbf16, #tpu.memory_space<vmem>>, %arg3: memref<1x208xf32, #tpu.memory_space<vmem>>, %arg4: memref<3x208x256xbf16, #tpu.memory_space<vmem>>, %arg5: memref<1x80xf32, #tpu.memory_space<vmem>>, %arg6: memref<5x80x128xbf16, #tpu.memory_space<vmem>>, %arg7: memref<1x128xf32, #tpu.memory_space<vmem>>, %arg8: memref<128x128xbf16, #tpu.memory_space<vmem>>, %arg9: memref<1x128xf32, #tpu.memory_space<vmem>>, %arg10: memref<128x128xbf16, #tpu.memory_space<vmem>>, %arg11: memref<1x128xf32, #tpu.memory_space<vmem>>, %arg12: memref<8x128xf32, #tpu.memory_space<vmem>>) attributes {dimension_semantics = [#tpu.dimension_semantics<parallel>], iteration_bounds = array<i64: 2>, scalar_prefetch = 0 : i64, scratch_operands = 0 : i64, tpu.core_type = #tpu.core_type<tc>, window_params = [{transform_indices = @transform_0, window_bounds = array<i64: 208, 84>}, {pipeline_mode = #tpu.pipeline_mode<synchronous>, transform_indices = @transform_1, window_bounds = array<i64: 84, 512>}, {pipeline_mode = #tpu.pipeline_mode<synchronous>, transform_indices = @transform_2, window_bounds = array<i64: 1, 208>}, {pipeline_mode = #tpu.pipeline_mode<synchronous>, transform_indices = @transform_3, window_bounds = array<i64: 3, 208, 256>}, {pipeline_mode = #tpu.pipeline_mode<synchronous>, transform_indices = @transform_4, window_bounds = array<i64: 1, 80>}, {pipeline_mode = #tpu.pipeline_mode<synchronous>, transform_indices = @transform_5, window_bounds = array<i64: 5, 80, 128>}, {pipeline_mode = #tpu.pipeline_mode<synchronous>, transform_indices = @transform_6, window_bounds = array<i64: 1, 128>}, {pipeline_mode = #tpu.pipeline_mode<synchronous>, transform_indices = @transform_7, window_bounds = array<i64: 128, 128>}, {pipeline_mode = #tpu.pipeline_mode<synchronous>, transform_indices = @transform_8, window_bounds = array<i64: 1, 128>}, {pipeline_mode = #tpu.pipeline_mode<synchronous>, transform_indices = @transform_9, window_bounds = array<i64: 128, 128>}, {pipeline_mode = #tpu.pipeline_mode<synchronous>, transform_indices = @transform_10, window_bounds = array<i64: 1, 128>}, {transform_indices = @transform_11, window_bounds = array<i64: 8, 128>}]} {
    %c0 = arith.constant 0 : index
    %c0_0 = arith.constant 0 : index
    %0 = vector.load %arg1[%c0, %c0_0] : memref<208x84xbf16, #tpu.memory_space<vmem>>, vector<208x84xbf16>
    %c0_1 = arith.constant 0 : index
    %c0_2 = arith.constant 0 : index
    %1 = vector.load %arg2[%c0_1, %c0_2] : memref<84x512xbf16, #tpu.memory_space<vmem>>, vector<84x512xbf16>
    %cst = arith.constant dense<0.000000e+00> : vector<208x512xf32>
    %2 = tpu.matmul %0, %1, %cst {dimension_numbers = #tpu.dot_dimension_numbers<[1], [0], [0], [1], [0, 0, 1, 1], [], []>} : vector<208x84xbf16>, vector<84x512xbf16>, vector<208x512xf32> -> vector<208x512xf32>
    %3 = vector.extract_strided_slice %2 {offsets = [0, 0], sizes = [56, 512], strides = [1, 1]} : vector<208x512xf32> to vector<56x512xf32>
    %4 = vector.extract_strided_slice %2 {offsets = [56, 0], sizes = [56, 512], strides = [1, 1]} : vector<208x512xf32> to vector<56x512xf32>
    %5 = arith.maximumf %3, %4 : vector<56x512xf32>
    %6 = vector.extract_strided_slice %5 {offsets = [0, 0], sizes = [56, 208], strides = [1, 1]} : vector<56x512xf32> to vector<56x208xf32>
    %7 = vector.extract_strided_slice %5 {offsets = [0, 256], sizes = [56, 208], strides = [1, 1]} : vector<56x512xf32> to vector<56x208xf32>
    %8 = arith.maximumf %6, %7 : vector<56x208xf32>
    %c0_3 = arith.constant 0 : index
    %c0_4 = arith.constant 0 : index
    %9 = vector.load %arg3[%c0_3, %c0_4] : memref<1x208xf32, #tpu.memory_space<vmem>>, vector<1x208xf32>
    %10 = vector.broadcast %9 : vector<1x208xf32> to vector<56x208xf32>
    %11 = arith.addf %8, %10 : vector<56x208xf32>
    %cst_5 = arith.constant 0.000000e+00 : f32
    %12 = vector.broadcast %cst_5 : f32 to vector<56x208xf32>
    %13 = arith.maximumf %11, %12 : vector<56x208xf32>
    %14 = vector.extract_strided_slice %2 {offsets = [112, 0], sizes = [48, 512], strides = [1, 1]} : vector<208x512xf32> to vector<48x512xf32>
    %15 = vector.extract_strided_slice %2 {offsets = [160, 0], sizes = [48, 512], strides = [1, 1]} : vector<208x512xf32> to vector<48x512xf32>
    %16 = arith.maximumf %14, %15 : vector<48x512xf32>
    %17 = vector.extract_strided_slice %16 {offsets = [0, 0], sizes = [48, 208], strides = [1, 1]} : vector<48x512xf32> to vector<48x208xf32>
    %18 = vector.extract_strided_slice %16 {offsets = [0, 256], sizes = [48, 208], strides = [1, 1]} : vector<48x512xf32> to vector<48x208xf32>
    %19 = arith.maximumf %17, %18 : vector<48x208xf32>
    %c0_6 = arith.constant 0 : index
    %c0_7 = arith.constant 0 : index
    %20 = vector.load %arg3[%c0_6, %c0_7] : memref<1x208xf32, #tpu.memory_space<vmem>>, vector<1x208xf32>
    %21 = vector.broadcast %20 : vector<1x208xf32> to vector<48x208xf32>
    %22 = arith.addf %19, %21 : vector<48x208xf32>
    %cst_8 = arith.constant 0.000000e+00 : f32
    %23 = vector.broadcast %cst_8 : f32 to vector<48x208xf32>
    %24 = arith.maximumf %22, %23 : vector<48x208xf32>
    %25 = arith.truncf %13 : vector<56x208xf32> to vector<56x208xbf16>
    %26 = arith.truncf %24 : vector<48x208xf32> to vector<48x208xbf16>
    %c0_9 = arith.constant 0 : index
    %c0_10 = arith.constant 0 : index
    %c0_11 = arith.constant 0 : index
    %27 = vector.load %arg4[%c0_9, %c0_10, %c0_11] : memref<3x208x256xbf16, #tpu.memory_space<vmem>>, vector<1x208x256xbf16>
    %28 = vector.shape_cast %27 : vector<1x208x256xbf16> to vector<208x256xbf16>
    %c1 = arith.constant 1 : index
    %c0_12 = arith.constant 0 : index
    %c0_13 = arith.constant 0 : index
    %29 = vector.load %arg4[%c1, %c0_12, %c0_13] : memref<3x208x256xbf16, #tpu.memory_space<vmem>>, vector<1x208x256xbf16>
    %30 = vector.shape_cast %29 : vector<1x208x256xbf16> to vector<208x256xbf16>
    %c2 = arith.constant 2 : index
    %c0_14 = arith.constant 0 : index
    %c0_15 = arith.constant 0 : index
    %31 = vector.load %arg4[%c2, %c0_14, %c0_15] : memref<3x208x256xbf16, #tpu.memory_space<vmem>>, vector<1x208x256xbf16>
    %32 = vector.shape_cast %31 : vector<1x208x256xbf16> to vector<208x256xbf16>
    %33 = vector.extract_strided_slice %25 {offsets = [0, 0], sizes = [40, 208], strides = [1, 1]} : vector<56x208xbf16> to vector<40x208xbf16>
    %cst_16 = arith.constant dense<0.000000e+00> : vector<40x256xf32>
    %34 = tpu.matmul %33, %28, %cst_16 {dimension_numbers = #tpu.dot_dimension_numbers<[1], [0], [0], [1], [0, 0, 1, 1], [], []>} : vector<40x208xbf16>, vector<208x256xbf16>, vector<40x256xf32> -> vector<40x256xf32>
    %35 = vector.extract_strided_slice %26 {offsets = [0, 0], sizes = [40, 208], strides = [1, 1]} : vector<48x208xbf16> to vector<40x208xbf16>
    %cst_17 = arith.constant dense<0.000000e+00> : vector<40x256xf32>
    %36 = tpu.matmul %35, %30, %cst_17 {dimension_numbers = #tpu.dot_dimension_numbers<[1], [0], [0], [1], [0, 0, 1, 1], [], []>} : vector<40x208xbf16>, vector<208x256xbf16>, vector<40x256xf32> -> vector<40x256xf32>
    %37 = arith.addf %34, %36 : vector<40x256xf32>
    %38 = vector.extract_strided_slice %25 {offsets = [8, 0], sizes = [40, 208], strides = [1, 1]} : vector<56x208xbf16> to vector<40x208xbf16>
    %cst_18 = arith.constant dense<0.000000e+00> : vector<40x256xf32>
    %39 = tpu.matmul %38, %32, %cst_18 {dimension_numbers = #tpu.dot_dimension_numbers<[1], [0], [0], [1], [0, 0, 1, 1], [], []>} : vector<40x208xbf16>, vector<208x256xbf16>, vector<40x256xf32> -> vector<40x256xf32>
    %40 = arith.addf %37, %39 : vector<40x256xf32>
    %41 = vector.extract_strided_slice %26 {offsets = [0, 0], sizes = [40, 208], strides = [1, 1]} : vector<48x208xbf16> to vector<40x208xbf16>
    %cst_19 = arith.constant dense<0.000000e+00> : vector<40x256xf32>
    %42 = tpu.matmul %41, %28, %cst_19 {dimension_numbers = #tpu.dot_dimension_numbers<[1], [0], [0], [1], [0, 0, 1, 1], [], []>} : vector<40x208xbf16>, vector<208x256xbf16>, vector<40x256xf32> -> vector<40x256xf32>
    %43 = vector.extract_strided_slice %25 {offsets = [8, 0], sizes = [40, 208], strides = [1, 1]} : vector<56x208xbf16> to vector<40x208xbf16>
    %cst_20 = arith.constant dense<0.000000e+00> : vector<40x256xf32>
    %44 = tpu.matmul %43, %30, %cst_20 {dimension_numbers = #tpu.dot_dimension_numbers<[1], [0], [0], [1], [0, 0, 1, 1], [], []>} : vector<40x208xbf16>, vector<208x256xbf16>, vector<40x256xf32> -> vector<40x256xf32>
    %45 = arith.addf %42, %44 : vector<40x256xf32>
    %46 = vector.extract_strided_slice %26 {offsets = [8, 0], sizes = [40, 208], strides = [1, 1]} : vector<48x208xbf16> to vector<40x208xbf16>
    %cst_21 = arith.constant dense<0.000000e+00> : vector<40x256xf32>
    %47 = tpu.matmul %46, %32, %cst_21 {dimension_numbers = #tpu.dot_dimension_numbers<[1], [0], [0], [1], [0, 0, 1, 1], [], []>} : vector<40x208xbf16>, vector<208x256xbf16>, vector<40x256xf32> -> vector<40x256xf32>
    %48 = arith.addf %45, %47 : vector<40x256xf32>
    %49 = arith.maximumf %40, %48 : vector<40x256xf32>
    %50 = vector.extract_strided_slice %49 {offsets = [0, 0], sizes = [40, 80], strides = [1, 1]} : vector<40x256xf32> to vector<40x80xf32>
    %51 = vector.extract_strided_slice %49 {offsets = [0, 128], sizes = [40, 80], strides = [1, 1]} : vector<40x256xf32> to vector<40x80xf32>
    %52 = arith.maximumf %50, %51 : vector<40x80xf32>
    %c0_22 = arith.constant 0 : index
    %c0_23 = arith.constant 0 : index
    %53 = vector.load %arg5[%c0_22, %c0_23] : memref<1x80xf32, #tpu.memory_space<vmem>>, vector<1x80xf32>
    %54 = vector.broadcast %53 : vector<1x80xf32> to vector<40x80xf32>
    %55 = arith.addf %52, %54 : vector<40x80xf32>
    %cst_24 = arith.constant 0.000000e+00 : f32
    %56 = vector.broadcast %cst_24 : f32 to vector<40x80xf32>
    %57 = arith.maximumf %55, %56 : vector<40x80xf32>
    %58 = arith.truncf %57 : vector<40x80xf32> to vector<40x80xbf16>
    %59 = vector.extract_strided_slice %58 {offsets = [0, 0], sizes = [8, 80], strides = [1, 1]} : vector<40x80xbf16> to vector<8x80xbf16>
    %c0_25 = arith.constant 0 : index
    %c0_26 = arith.constant 0 : index
    %c0_27 = arith.constant 0 : index
    %60 = vector.load %arg6[%c0_25, %c0_26, %c0_27] : memref<5x80x128xbf16, #tpu.memory_space<vmem>>, vector<1x80x128xbf16>
    %61 = vector.shape_cast %60 : vector<1x80x128xbf16> to vector<80x128xbf16>
    %cst_28 = arith.constant dense<0.000000e+00> : vector<8x128xf32>
    %62 = tpu.matmul %59, %61, %cst_28 {dimension_numbers = #tpu.dot_dimension_numbers<[1], [0], [0], [1], [0, 0, 1, 1], [], []>} : vector<8x80xbf16>, vector<80x128xbf16>, vector<8x128xf32> -> vector<8x128xf32>
    %63 = vector.extract_strided_slice %58 {offsets = [8, 0], sizes = [8, 80], strides = [1, 1]} : vector<40x80xbf16> to vector<8x80xbf16>
    %c1_29 = arith.constant 1 : index
    %c0_30 = arith.constant 0 : index
    %c0_31 = arith.constant 0 : index
    %64 = vector.load %arg6[%c1_29, %c0_30, %c0_31] : memref<5x80x128xbf16, #tpu.memory_space<vmem>>, vector<1x80x128xbf16>
    %65 = vector.shape_cast %64 : vector<1x80x128xbf16> to vector<80x128xbf16>
    %cst_32 = arith.constant dense<0.000000e+00> : vector<8x128xf32>
    %66 = tpu.matmul %63, %65, %cst_32 {dimension_numbers = #tpu.dot_dimension_numbers<[1], [0], [0], [1], [0, 0, 1, 1], [], []>} : vector<8x80xbf16>, vector<80x128xbf16>, vector<8x128xf32> -> vector<8x128xf32>
    %67 = arith.addf %62, %66 : vector<8x128xf32>
    %68 = vector.extract_strided_slice %58 {offsets = [16, 0], sizes = [8, 80], strides = [1, 1]} : vector<40x80xbf16> to vector<8x80xbf16>
    %c2_33 = arith.constant 2 : index
    %c0_34 = arith.constant 0 : index
    %c0_35 = arith.constant 0 : index
    %69 = vector.load %arg6[%c2_33, %c0_34, %c0_35] : memref<5x80x128xbf16, #tpu.memory_space<vmem>>, vector<1x80x128xbf16>
    %70 = vector.shape_cast %69 : vector<1x80x128xbf16> to vector<80x128xbf16>
    %cst_36 = arith.constant dense<0.000000e+00> : vector<8x128xf32>
    %71 = tpu.matmul %68, %70, %cst_36 {dimension_numbers = #tpu.dot_dimension_numbers<[1], [0], [0], [1], [0, 0, 1, 1], [], []>} : vector<8x80xbf16>, vector<80x128xbf16>, vector<8x128xf32> -> vector<8x128xf32>
    %72 = arith.addf %67, %71 : vector<8x128xf32>
    %73 = vector.extract_strided_slice %58 {offsets = [24, 0], sizes = [8, 80], strides = [1, 1]} : vector<40x80xbf16> to vector<8x80xbf16>
    %c3 = arith.constant 3 : index
    %c0_37 = arith.constant 0 : index
    %c0_38 = arith.constant 0 : index
    %74 = vector.load %arg6[%c3, %c0_37, %c0_38] : memref<5x80x128xbf16, #tpu.memory_space<vmem>>, vector<1x80x128xbf16>
    %75 = vector.shape_cast %74 : vector<1x80x128xbf16> to vector<80x128xbf16>
    %cst_39 = arith.constant dense<0.000000e+00> : vector<8x128xf32>
    %76 = tpu.matmul %73, %75, %cst_39 {dimension_numbers = #tpu.dot_dimension_numbers<[1], [0], [0], [1], [0, 0, 1, 1], [], []>} : vector<8x80xbf16>, vector<80x128xbf16>, vector<8x128xf32> -> vector<8x128xf32>
    %77 = arith.addf %72, %76 : vector<8x128xf32>
    %78 = vector.extract_strided_slice %58 {offsets = [32, 0], sizes = [8, 80], strides = [1, 1]} : vector<40x80xbf16> to vector<8x80xbf16>
    %c4 = arith.constant 4 : index
    %c0_40 = arith.constant 0 : index
    %c0_41 = arith.constant 0 : index
    %79 = vector.load %arg6[%c4, %c0_40, %c0_41] : memref<5x80x128xbf16, #tpu.memory_space<vmem>>, vector<1x80x128xbf16>
    %80 = vector.shape_cast %79 : vector<1x80x128xbf16> to vector<80x128xbf16>
    %cst_42 = arith.constant dense<0.000000e+00> : vector<8x128xf32>
    %81 = tpu.matmul %78, %80, %cst_42 {dimension_numbers = #tpu.dot_dimension_numbers<[1], [0], [0], [1], [0, 0, 1, 1], [], []>} : vector<8x80xbf16>, vector<80x128xbf16>, vector<8x128xf32> -> vector<8x128xf32>
    %82 = arith.addf %77, %81 : vector<8x128xf32>
    %c0_43 = arith.constant 0 : index
    %c0_44 = arith.constant 0 : index
    %83 = vector.load %arg7[%c0_43, %c0_44] : memref<1x128xf32, #tpu.memory_space<vmem>>, vector<1x128xf32>
    %84 = vector.broadcast %83 : vector<1x128xf32> to vector<8x128xf32>
    %85 = arith.addf %82, %84 : vector<8x128xf32>
    %cst_45 = arith.constant 0.000000e+00 : f32
    %86 = vector.broadcast %cst_45 : f32 to vector<8x128xf32>
    %87 = arith.maximumf %85, %86 : vector<8x128xf32>
    %88 = arith.truncf %87 : vector<8x128xf32> to vector<8x128xbf16>
    %c0_46 = arith.constant 0 : index
    %c0_47 = arith.constant 0 : index
    %89 = vector.load %arg8[%c0_46, %c0_47] : memref<128x128xbf16, #tpu.memory_space<vmem>>, vector<128x128xbf16>
    %cst_48 = arith.constant dense<0.000000e+00> : vector<8x128xf32>
    %90 = tpu.matmul %88, %89, %cst_48 {dimension_numbers = #tpu.dot_dimension_numbers<[1], [0], [0], [1], [0, 0, 1, 1], [], []>} : vector<8x128xbf16>, vector<128x128xbf16>, vector<8x128xf32> -> vector<8x128xf32>
    %c0_49 = arith.constant 0 : index
    %c0_50 = arith.constant 0 : index
    %91 = vector.load %arg9[%c0_49, %c0_50] : memref<1x128xf32, #tpu.memory_space<vmem>>, vector<1x128xf32>
    %92 = vector.broadcast %91 : vector<1x128xf32> to vector<8x128xf32>
    %93 = arith.addf %90, %92 : vector<8x128xf32>
    %cst_51 = arith.constant 0.000000e+00 : f32
    %94 = vector.broadcast %cst_51 : f32 to vector<8x128xf32>
    %95 = arith.maximumf %93, %94 : vector<8x128xf32>
    %96 = arith.truncf %95 : vector<8x128xf32> to vector<8x128xbf16>
    %c0_52 = arith.constant 0 : index
    %c0_53 = arith.constant 0 : index
    %97 = vector.load %arg10[%c0_52, %c0_53] : memref<128x128xbf16, #tpu.memory_space<vmem>>, vector<128x128xbf16>
    %cst_54 = arith.constant dense<0.000000e+00> : vector<8x128xf32>
    %98 = tpu.matmul %96, %97, %cst_54 {dimension_numbers = #tpu.dot_dimension_numbers<[1], [0], [0], [1], [0, 0, 1, 1], [], []>} : vector<8x128xbf16>, vector<128x128xbf16>, vector<8x128xf32> -> vector<8x128xf32>
    %c0_55 = arith.constant 0 : index
    %c0_56 = arith.constant 0 : index
    %99 = vector.load %arg11[%c0_55, %c0_56] : memref<1x128xf32, #tpu.memory_space<vmem>>, vector<1x128xf32>
    %100 = vector.broadcast %99 : vector<1x128xf32> to vector<8x128xf32>
    %101 = arith.addf %98, %100 : vector<8x128xf32>
    %cst_57 = arith.constant dense<0xFF800000> : vector<8xf32>
    %102 = vector.multi_reduction <maximumf>, %101, %cst_57 [1] : vector<8x128xf32> to vector<8xf32>
    %103 = vector.shape_cast %102 : vector<8xf32> to vector<8x1xf32>
    %104 = vector.broadcast %103 : vector<8x1xf32> to vector<8x128xf32>
    %105 = arith.subf %101, %104 : vector<8x128xf32>
    %106 = math.exp %105 : vector<8x128xf32>
    %cst_58 = arith.constant dense<0.000000e+00> : vector<8xf32>
    %107 = vector.multi_reduction <add>, %106, %cst_58 [1] : vector<8x128xf32> to vector<8xf32>
    %108 = vector.shape_cast %107 : vector<8xf32> to vector<8x1xf32>
    %109 = vector.broadcast %108 : vector<8x1xf32> to vector<8x128xf32>
    %110 = arith.divf %106, %109 : vector<8x128xf32>
    %c0_59 = arith.constant 0 : index
    %c0_60 = arith.constant 0 : index
    %111 = vector.load %arg12[%c0_59, %c0_60] : memref<8x128xf32, #tpu.memory_space<vmem>>, vector<8x128xf32>
    tpu.vector_store %arg12[%c0_59, %c0_60], %110 {strides = array<i32>} : memref<8x128xf32, #tpu.memory_space<vmem>>, vector<8x128xf32>,
    return
  }
  func.func @transform_0(%arg0: i32) -> (i32, i32) {
    %c0_i32 = arith.constant 0 : i32
    %c0_i32_0 = arith.constant 0 : i32
    return %arg0, %c0_i32 : i32, i32
  }
  func.func @transform_1(%arg0: i32) -> (i32, i32) {
    %c0_i32 = arith.constant 0 : i32
    %c0_i32_0 = arith.constant 0 : i32
    %c0_i32_1 = arith.constant 0 : i32
    return %c0_i32, %c0_i32_0 : i32, i32
  }
  func.func @transform_2(%arg0: i32) -> (i32, i32) {
    %c0_i32 = arith.constant 0 : i32
    %c0_i32_0 = arith.constant 0 : i32
    %c0_i32_1 = arith.constant 0 : i32
    return %c0_i32, %c0_i32_0 : i32, i32
  }
  func.func @transform_3(%arg0: i32) -> (i32, i32, i32) {
    %c0_i32 = arith.constant 0 : i32
    %c0_i32_0 = arith.constant 0 : i32
    %c0_i32_1 = arith.constant 0 : i32
    %c0_i32_2 = arith.constant 0 : i32
    return %c0_i32, %c0_i32_0, %c0_i32_1 : i32, i32, i32
  }
  func.func @transform_4(%arg0: i32) -> (i32, i32) {
    %c0_i32 = arith.constant 0 : i32
    %c0_i32_0 = arith.constant 0 : i32
    %c0_i32_1 = arith.constant 0 : i32
    return %c0_i32, %c0_i32_0 : i32, i32
  }
  func.func @transform_5(%arg0: i32) -> (i32, i32, i32) {
    %c0_i32 = arith.constant 0 : i32
    %c0_i32_0 = arith.constant 0 : i32
    %c0_i32_1 = arith.constant 0 : i32
    %c0_i32_2 = arith.constant 0 : i32
    return %c0_i32, %c0_i32_0, %c0_i32_1 : i32, i32, i32
  }
  func.func @transform_6(%arg0: i32) -> (i32, i32) {
    %c0_i32 = arith.constant 0 : i32
    %c0_i32_0 = arith.constant 0 : i32
    %c0_i32_1 = arith.constant 0 : i32
    return %c0_i32, %c0_i32_0 : i32, i32
  }
  func.func @transform_7(%arg0: i32) -> (i32, i32) {
    %c0_i32 = arith.constant 0 : i32
    %c0_i32_0 = arith.constant 0 : i32
    %c0_i32_1 = arith.constant 0 : i32
    return %c0_i32, %c0_i32_0 : i32, i32
  }
  func.func @transform_8(%arg0: i32) -> (i32, i32) {
    %c0_i32 = arith.constant 0 : i32
    %c0_i32_0 = arith.constant 0 : i32
    %c0_i32_1 = arith.constant 0 : i32
    return %c0_i32, %c0_i32_0 : i32, i32
  }
  func.func @transform_9(%arg0: i32) -> (i32, i32) {
    %c0_i32 = arith.constant 0 : i32
    %c0_i32_0 = arith.constant 0 : i32
    %c0_i32_1 = arith.constant 0 : i32
    return %c0_i32, %c0_i32_0 : i32, i32
  }
  func.func @transform_10(%arg0: i32) -> (i32, i32) {
    %c0_i32 = arith.constant 0 : i32
    %c0_i32_0 = arith.constant 0 : i32
    %c0_i32_1 = arith.constant 0 : i32
    return %c0_i32, %c0_i32_0 : i32, i32
  }
  func.func @transform_11(%arg0: i32) -> (i32, i32) {
    %c0_i32 = arith.constant 0 : i32
    %c0_i32_0 = arith.constant 0 : i32
    return %arg0, %c0_i32 : i32, i32
  }
}

</mosaic_0001>

<llo_original>
// kernel: cnn_forward.1
$region0: #{cnn_forward.1}
  #allocation0 [shape = 'u32[]', space=smem, size = 0x4, offset = 0x4, fixed_abs, tag = 'smem constant byte address 0x4 - core index']
  #allocation1 [shape = 'u32[144,128]{1,0:T(1,128)}', space=vmem, size = 0x12000, scoped, tag = 'internal scratch']
  %s0 = inlined_call_operand.vmem [shape: bf16[416,84], index: 0, kind: input, shape index: {}]
  %s1 = inlined_call_operand.vmem [shape: bf16[84,512], index: 1, kind: input, shape index: {}]
  %s2 = inlined_call_operand.vmem [shape: f32[1,208], index: 2, kind: input, shape index: {}]
  %s3 = inlined_call_operand.vmem [shape: bf16[3,208,256], index: 3, kind: input, shape index: {}]
  %s4 = inlined_call_operand.vmem [shape: f32[1,80], index: 4, kind: input, shape index: {}]
  %s5 = inlined_call_operand.vmem [shape: bf16[5,80,128], index: 5, kind: input, shape index: {}]
  %s6 = inlined_call_operand.vmem [shape: f32[1,128], index: 6, kind: input, shape index: {}]
  %s7 = inlined_call_operand.vmem [shape: bf16[128,128], index: 7, kind: input, shape index: {}]
  %s8 = inlined_call_operand.vmem [shape: f32[1,128], index: 8, kind: input, shape index: {}]
  %s9 = inlined_call_operand.vmem [shape: bf16[128,128], index: 9, kind: input, shape index: {}]
  %s10 = inlined_call_operand.vmem [shape: f32[1,128], index: 10, kind: input, shape index: {}]
  %s11 = inlined_call_operand.hbm [shape: f32[16,128], index: 11, kind: output, shape index: {}]
  %s12 = sld [smem:[#allocation0]]
  $region77: #{cnn_forward.1} parent=0
    _
  %s14 = ssub.s32 1, %s12
  %s15 = scalar_select 0, %s14, %s12
  $region1: #{cnn_forward.1} parent=0
    #allocation2 [shape = 'u8[8192]{0}', space=vmem, size = 0x2000, scoped, tag = 'output window, operand 0']
    #allocation3 [shape = 's32[2]{0}', space=sflag, size = 0x8, scoped, tag = 'scoped memory for cnn_forward.1']
    %16 = vsyncpa [#allocation3], 0
    %s17 = scalar_lea.sflag [#allocation3], 1
    %18 = vsyncpa %s17, 0
    loop: start=0, step=1, limit=4
    $region2: #{cnn_forward.1} parent=1 // loop_pre_header
      _
    $region3: #{cnn_forward.1} parent=1 // loop_header
      %s20 = sphi 0, %s24
      %p21 = scmp.ge.s32.totalorder %s20, 4
      %s30 = sphi 0, %s32
      %s33 = sphi 0, %s30
      %s34 = sphi 0, %s33
      %s50 = sphi 0, %s34
      %s54 = sphi 0, %s54
      %s56 = sphi 0, %s54
      %s57 = sphi 0, %s56
      %s71 = sphi 0, %s57
      %s75 = sphi 0, %s75
      %s77 = sphi 0, %s75
      %s78 = sphi 0, %s77
      %s92 = sphi 0, %s78
      %s96 = sphi 0, %s96
      %s98 = sphi 0, %s96
      %s99 = sphi 0, %s98
      %s113 = sphi 0, %s99
      %s117 = sphi 0, %s117
      %s119 = sphi 0, %s117
      %s120 = sphi 0, %s119
      %s134 = sphi 0, %s120
      %s138 = sphi 0, %s138
      %s140 = sphi 0, %s138
      %s141 = sphi 0, %s140
      %s155 = sphi 0, %s141
      %s159 = sphi 0, %s159
      %s161 = sphi 0, %s159
      %s162 = sphi 0, %s161
      %s176 = sphi 0, %s162
      %s180 = sphi 0, %s180
      %s182 = sphi 0, %s180
      %s183 = sphi 0, %s182
      %s197 = sphi 0, %s183
      %s201 = sphi 0, %s201
      %s203 = sphi 0, %s201
      %s204 = sphi 0, %s203
      %s218 = sphi 0, %s204
      %s222 = sphi 0, %s222
      %s224 = sphi 0, %s222
      %s225 = sphi 0, %s224
      %s239 = sphi 0, %s225
      %s243 = sphi 0, %s243
      %s245 = sphi 0, %s243
      %s246 = sphi 0, %s245
      %s260 = sphi 0, %s246
      %s266 = sphi 0, %s268
      %s269 = sphi 0, %s266
      %s270 = sphi 0, %s269
      %s286 = sphi 0, %s270
    $region4: #{cnn_forward.1} parent=1 // loop_header_branch
      %23 = sbr.rel (%p21) target = $region8
    $region5: #{cnn_forward.1} parent=1 // loop_body
      %s25 = ssub.s32 %s20, 1
      %s26 = ssub.s32 %s20, 2
      %s27 = sadd.s32 %s20, 1
      %s28 = ssub.s32 %s20, %s27
      %p29 = scmp.eq.s32.totalorder %s28, 0
      %s31 = sadd.s32 %s30, 1
      %s32 = scalar_select %p29, %s30, %s31
      %p35 = pneg %p29
      %p36 = scmp.eq.s32.totalorder %s20, 1
      %p37 = por %p35, %p36
      %p38 = scmp.ne.s32.totalorder %s30, %s33
      %p39 = scmp.eq.s32.totalorder %s20, 0
      %p40 = por %p38, %p39
      %p41 = scmp.ne.s32.totalorder %s30, %s33
      %p42 = scmp.eq.s32.totalorder %s25, 1
      %p43 = por %p41, %p42
      %p44 = scmp.ne.s32.totalorder %s33, %s34
      %p45 = scmp.eq.s32.totalorder %s25, 0
      %p46 = por %p44, %p45
      %p47 = scmp.ne.s32.totalorder %s33, %s34
      %p48 = scmp.eq.s32.totalorder %s26, 1
      %p49 = por %p47, %p48
      %p51 = scmp.ne.s32.totalorder %s34, %s50
      %p52 = scmp.eq.s32.totalorder %s26, 0
      %p53 = por %p51, %p52
      %s55 = sadd.s32 %s54, 1
      %p58 = scmp.eq.s32.totalorder %s20, 1
      %p59 = scmp.ne.s32.totalorder %s54, %s56
      %p60 = scmp.eq.s32.totalorder %s20, 0
      %p61 = por %p59, %p60
      %p62 = scmp.ne.s32.totalorder %s54, %s56
      %p63 = scmp.eq.s32.totalorder %s25, 1
      %p64 = por %p62, %p63
      %p65 = scmp.ne.s32.totalorder %s56, %s57
      %p66 = scmp.eq.s32.totalorder %s25, 0
      %p67 = por %p65, %p66
      %p68 = scmp.ne.s32.totalorder %s56, %s57
      %p69 = scmp.eq.s32.totalorder %s26, 1
      %p70 = por %p68, %p69
      %p72 = scmp.ne.s32.totalorder %s57, %s71
      %p73 = scmp.eq.s32.totalorder %s26, 0
      %p74 = por %p72, %p73
      %s76 = sadd.s32 %s75, 1
      %p79 = scmp.eq.s32.totalorder %s20, 1
      %p80 = scmp.ne.s32.totalorder %s75, %s77
      %p81 = scmp.eq.s32.totalorder %s20, 0
      %p82 = por %p80, %p81
      %p83 = scmp.ne.s32.totalorder %s75, %s77
      %p84 = scmp.eq.s32.totalorder %s25, 1
      %p85 = por %p83, %p84
      %p86 = scmp.ne.s32.totalorder %s77, %s78
      %p87 = scmp.eq.s32.totalorder %s25, 0
      %p88 = por %p86, %p87
      %p89 = scmp.ne.s32.totalorder %s77, %s78
      %p90 = scmp.eq.s32.totalorder %s26, 1
      %p91 = por %p89, %p90
      %p93 = scmp.ne.s32.totalorder %s78, %s92
      %p94 = scmp.eq.s32.totalorder %s26, 0
      %p95 = por %p93, %p94
      %s97 = sadd.s32 %s96, 1
      %p100 = scmp.eq.s32.totalorder %s20, 1
      %p101 = scmp.ne.s32.totalorder %s96, %s98
      %p102 = scmp.eq.s32.totalorder %s20, 0
      %p103 = por %p101, %p102
      %p104 = scmp.ne.s32.totalorder %s96, %s98
      %p105 = scmp.eq.s32.totalorder %s25, 1
      %p106 = por %p104, %p105
      %p107 = scmp.ne.s32.totalorder %s98, %s99
      %p108 = scmp.eq.s32.totalorder %s25, 0
      %p109 = por %p107, %p108
      %p110 = scmp.ne.s32.totalorder %s98, %s99
      %p111 = scmp.eq.s32.totalorder %s26, 1
      %p112 = por %p110, %p111
      %p114 = scmp.ne.s32.totalorder %s99, %s113
      %p115 = scmp.eq.s32.totalorder %s26, 0
      %p116 = por %p114, %p115
      %s118 = sadd.s32 %s117, 1
      %p121 = scmp.eq.s32.totalorder %s20, 1
      %p122 = scmp.ne.s32.totalorder %s117, %s119
      %p123 = scmp.eq.s32.totalorder %s20, 0
      %p124 = por %p122, %p123
      %p125 = scmp.ne.s32.totalorder %s117, %s119
      %p126 = scmp.eq.s32.totalorder %s25, 1
      %p127 = por %p125, %p126
      %p128 = scmp.ne.s32.totalorder %s119, %s120
      %p129 = scmp.eq.s32.totalorder %s25, 0
      %p130 = por %p128, %p129
      %p131 = scmp.ne.s32.totalorder %s119, %s120
      %p132 = scmp.eq.s32.totalorder %s26, 1
      %p133 = por %p131, %p132
      %p135 = scmp.ne.s32.totalorder %s120, %s134
      %p136 = scmp.eq.s32.totalorder %s26, 0
      %p137 = por %p135, %p136
      %s139 = sadd.s32 %s138, 1
      %p142 = scmp.eq.s32.totalorder %s20, 1
      %p143 = scmp.ne.s32.totalorder %s138, %s140
      %p144 = scmp.eq.s32.totalorder %s20, 0
      %p145 = por %p143, %p144
      %p146 = scmp.ne.s32.totalorder %s138, %s140
      %p147 = scmp.eq.s32.totalorder %s25, 1
      %p148 = por %p146, %p147
      %p149 = scmp.ne.s32.totalorder %s140, %s141
      %p150 = scmp.eq.s32.totalorder %s25, 0
      %p151 = por %p149, %p150
      %p152 = scmp.ne.s32.totalorder %s140, %s141
      %p153 = scmp.eq.s32.totalorder %s26, 1
      %p154 = por %p152, %p153
      %p156 = scmp.ne.s32.totalorder %s141, %s155
      %p157 = scmp.eq.s32.totalorder %s26, 0
      %p158 = por %p156, %p157
      %s160 = sadd.s32 %s159, 1
      %p163 = scmp.eq.s32.totalorder %s20, 1
      %p164 = scmp.ne.s32.totalorder %s159, %s161
      %p165 = scmp.eq.s32.totalorder %s20, 0
      %p166 = por %p164, %p165
      %p167 = scmp.ne.s32.totalorder %s159, %s161
      %p168 = scmp.eq.s32.totalorder %s25, 1
      %p169 = por %p167, %p168
      %p170 = scmp.ne.s32.totalorder %s161, %s162
      %p171 = scmp.eq.s32.totalorder %s25, 0
      %p172 = por %p170, %p171
      %p173 = scmp.ne.s32.totalorder %s161, %s162
      %p174 = scmp.eq.s32.totalorder %s26, 1
      %p175 = por %p173, %p174
      %p177 = scmp.ne.s32.totalorder %s162, %s176
      %p178 = scmp.eq.s32.totalorder %s26, 0
      %p179 = por %p177, %p178
      %s181 = sadd.s32 %s180, 1
      %p184 = scmp.eq.s32.totalorder %s20, 1
      %p185 = scmp.ne.s32.totalorder %s180, %s182
      %p186 = scmp.eq.s32.totalorder %s20, 0
      %p187 = por %p185, %p186
      %p188 = scmp.ne.s32.totalorder %s180, %s182
      %p189 = scmp.eq.s32.totalorder %s25, 1
      %p190 = por %p188, %p189
      %p191 = scmp.ne.s32.totalorder %s182, %s183
      %p192 = scmp.eq.s32.totalorder %s25, 0
      %p193 = por %p191, %p192
      %p194 = scmp.ne.s32.totalorder %s182, %s183
      %p195 = scmp.eq.s32.totalorder %s26, 1
      %p196 = por %p194, %p195
      %p198 = scmp.ne.s32.totalorder %s183, %s197
      %p199 = scmp.eq.s32.totalorder %s26, 0
      %p200 = por %p198, %p199
      %s202 = sadd.s32 %s201, 1
      %p205 = scmp.eq.s32.totalorder %s20, 1
      %p206 = scmp.ne.s32.totalorder %s201, %s203
      %p207 = scmp.eq.s32.totalorder %s20, 0
      %p208 = por %p206, %p207
      %p209 = scmp.ne.s32.totalorder %s201, %s203
      %p210 = scmp.eq.s32.totalorder %s25, 1
      %p211 = por %p209, %p210
      %p212 = scmp.ne.s32.totalorder %s203, %s204
      %p213 = scmp.eq.s32.totalorder %s25, 0
      %p214 = por %p212, %p213
      %p215 = scmp.ne.s32.totalorder %s203, %s204
      %p216 = scmp.eq.s32.totalorder %s26, 1
      %p217 = por %p215, %p216
      %p219 = scmp.ne.s32.totalorder %s204, %s218
      %p220 = scmp.eq.s32.totalorder %s26, 0
      %p221 = por %p219, %p220
      %s223 = sadd.s32 %s222, 1
      %p226 = scmp.eq.s32.totalorder %s20, 1
      %p227 = scmp.ne.s32.totalorder %s222, %s224
      %p228 = scmp.eq.s32.totalorder %s20, 0
      %p229 = por %p227, %p228
      %p230 = scmp.ne.s32.totalorder %s222, %s224
      %p231 = scmp.eq.s32.totalorder %s25, 1
      %p232 = por %p230, %p231
      %p233 = scmp.ne.s32.totalorder %s224, %s225
      %p234 = scmp.eq.s32.totalorder %s25, 0
      %p235 = por %p233, %p234
      %p236 = scmp.ne.s32.totalorder %s224, %s225
      %p237 = scmp.eq.s32.totalorder %s26, 1
      %p238 = por %p236, %p237
      %p240 = scmp.ne.s32.totalorder %s225, %s239
      %p241 = scmp.eq.s32.totalorder %s26, 0
      %p242 = por %p240, %p241
      %s244 = sadd.s32 %s243, 1
      %p247 = scmp.eq.s32.totalorder %s20, 1
      %p248 = scmp.ne.s32.totalorder %s243, %s245
      %p249 = scmp.eq.s32.totalorder %s20, 0
      %p250 = por %p248, %p249
      %p251 = scmp.ne.s32.totalorder %s243, %s245
      %p252 = scmp.eq.s32.totalorder %s25, 1
      %p253 = por %p251, %p252
      %p254 = scmp.ne.s32.totalorder %s245, %s246
      %p255 = scmp.eq.s32.totalorder %s25, 0
      %p256 = por %p254, %p255
      %p257 = scmp.ne.s32.totalorder %s245, %s246
      %p258 = scmp.eq.s32.totalorder %s26, 1
      %p259 = por %p257, %p258
      %p261 = scmp.ne.s32.totalorder %s246, %s260
      %p262 = scmp.eq.s32.totalorder %s26, 0
      %p263 = por %p261, %p262
      %s264 = ssub.s32 %s20, %s27
      %p265 = scmp.eq.s32.totalorder %s264, 0
      %s267 = sadd.s32 %s266, 1
      %s268 = scalar_select %p265, %s266, %s267
      %p271 = pneg %p265
      %p272 = scmp.eq.s32.totalorder %s20, 1
      %p273 = por %p271, %p272
      %p274 = scmp.ne.s32.totalorder %s266, %s269
      %p275 = scmp.eq.s32.totalorder %s20, 0
      %p276 = por %p274, %p275
      %p277 = scmp.ne.s32.totalorder %s266, %s269
      %p278 = scmp.eq.s32.totalorder %s25, 1
      %p279 = por %p277, %p278
      %p280 = scmp.ne.s32.totalorder %s269, %s270
      %p281 = scmp.eq.s32.totalorder %s25, 0
      %p282 = por %p280, %p281
      %p283 = scmp.ne.s32.totalorder %s269, %s270
      %p284 = scmp.eq.s32.totalorder %s26, 1
      %p285 = por %p283, %p284
      %p287 = scmp.ne.s32.totalorder %s270, %s286
      %p288 = scmp.eq.s32.totalorder %s26, 0
      %p289 = por %p287, %p288
      %p290 = scmp.le.s32.totalorder 1, %s20
      %p291 = scmp.lt.s32.totalorder %s20, 3
      %p292 = pnand %p290, %p291
      %p293 = pneg %p292
      // Predicated region
      $region9: #{cnn_forward.1} parent=5 // pred_check
        _
      $region10: #{cnn_forward.1} parent=5 // pred_check_branch
        %295 = sbr.rel (%p292) target = $region12
      $region11: #{cnn_forward.1} parent=5 // pred_region
        %s296 = ssub.s32 %s20, 1
        // Predicated region
        $region13: #{cnn_forward.1} parent=11 // pred_check
          %p297 = pneg %p67
        $region14: #{cnn_forward.1} parent=11 // pred_check_branch
          %299 = sbr.rel (%p297) target = $region16
        $region15: #{cnn_forward.1} parent=11 // pred_region
          _
        $region16: #{cnn_forward.1} parent=11 // pred_fallthru
          _
        // Predicated region
        $region17: #{cnn_forward.1} parent=11 // pred_check
          %p300 = pneg %p88
        $region18: #{cnn_forward.1} parent=11 // pred_check_branch
          %302 = sbr.rel (%p300) target = $region20
        $region19: #{cnn_forward.1} parent=11 // pred_region
          _
        $region20: #{cnn_forward.1} parent=11 // pred_fallthru
          _
        // Predicated region
        $region21: #{cnn_forward.1} parent=11 // pred_check
          %p303 = pneg %p109
        $region22: #{cnn_forward.1} parent=11 // pred_check_branch
          %305 = sbr.rel (%p303) target = $region24
        $region23: #{cnn_forward.1} parent=11 // pred_region
          _
        $region24: #{cnn_forward.1} parent=11 // pred_fallthru
          _
        // Predicated region
        $region25: #{cnn_forward.1} parent=11 // pred_check
          %p306 = pneg %p130
        $region26: #{cnn_forward.1} parent=11 // pred_check_branch
          %308 = sbr.rel (%p306) target = $region28
        $region27: #{cnn_forward.1} parent=11 // pred_region
          _
        $region28: #{cnn_forward.1} parent=11 // pred_fallthru
          _
        // Predicated region
        $region29: #{cnn_forward.1} parent=11 // pred_check
          %p309 = pneg %p151
        $region30: #{cnn_forward.1} parent=11 // pred_check_branch
          %311 = sbr.rel (%p309) target = $region32
        $region31: #{cnn_forward.1} parent=11 // pred_region
          _
        $region32: #{cnn_forward.1} parent=11 // pred_fallthru
          _
        // Predicated region
        $region33: #{cnn_forward.1} parent=11 // pred_check
          %p312 = pneg %p172
        $region34: #{cnn_forward.1} parent=11 // pred_check_branch
          %314 = sbr.rel (%p312) target = $region36
        $region35: #{cnn_forward.1} parent=11 // pred_region
          _
        $region36: #{cnn_forward.1} parent=11 // pred_fallthru
          _
        // Predicated region
        $region37: #{cnn_forward.1} parent=11 // pred_check
          %p315 = pneg %p193
        $region38: #{cnn_forward.1} parent=11 // pred_check_branch
          %317 = sbr.rel (%p315) target = $region40
        $region39: #{cnn_forward.1} parent=11 // pred_region
          _
        $region40: #{cnn_forward.1} parent=11 // pred_fallthru
          _
        // Predicated region
        $region41: #{cnn_forward.1} parent=11 // pred_check
          %p318 = pneg %p214
        $region42: #{cnn_forward.1} parent=11 // pred_check_branch
          %320 = sbr.rel (%p318) target = $region44
        $region43: #{cnn_forward.1} parent=11 // pred_region
          _
        $region44: #{cnn_forward.1} parent=11 // pred_fallthru
          _
        // Predicated region
        $region45: #{cnn_forward.1} parent=11 // pred_check
          %p321 = pneg %p235
        $region46: #{cnn_forward.1} parent=11 // pred_check_branch
          %323 = sbr.rel (%p321) target = $region48
        $region47: #{cnn_forward.1} parent=11 // pred_region
          _
        $region48: #{cnn_forward.1} parent=11 // pred_fallthru
          _
        // Predicated region
        $region49: #{cnn_forward.1} parent=11 // pred_check
          %p324 = pneg %p256
        $region50: #{cnn_forward.1} parent=11 // pred_check_branch
          %326 = sbr.rel (%p324) target = $region52
        $region51: #{cnn_forward.1} parent=11 // pred_region
          _
        $region52: #{cnn_forward.1} parent=11 // pred_fallthru
          _
      $region12: #{cnn_forward.1} parent=5 // pred_fallthru
        _
      %p327 = scmp.lt.s32.totalorder %s20, 2
      // Predicated region
      $region53: #{cnn_forward.1} parent=5 // pred_check
        %p328 = pneg %p327
      $region54: #{cnn_forward.1} parent=5 // pred_check_branch
        %330 = sbr.rel (%p328) target = $region56
      $region55: #{cnn_forward.1} parent=5 // pred_region
        // Predicated region
        $region57: #{cnn_forward.1} parent=55 // pred_check
          %p331 = pneg %p40
        $region58: #{cnn_forward.1} parent=55 // pred_check_branch
          %333 = sbr.rel (%p331) target = $region60
        $region59: #{cnn_forward.1} parent=55 // pred_region
          %s334 = smul.u32 26, %s20
          %p335 = scmp.lt.s32.totalorder %s334, 51
          %s336 = scalar_select %p335, %s334, 51
          %s337 = smul.addr %s336, 4
          %s338 = scalar_lea.vmem %s0, %s337
          %s339 = smul.u32 26, %s20
        $region60: #{cnn_forward.1} parent=55 // pred_fallthru
          _
      $region56: #{cnn_forward.1} parent=5 // pred_fallthru
        _
      %p340 = scmp.le.s32.totalorder 1, %s20
      %p341 = scmp.lt.s32.totalorder %s20, 3
      %p342 = pnand %p340, %p341
      %p343 = pneg %p342
      // Predicated region
      $region61: #{cnn_forward.1} parent=5 // pred_check
        _
      $region62: #{cnn_forward.1} parent=5 // pred_check_branch
        %345 = sbr.rel (%p342) target = $region64
      $region63: #{cnn_forward.1} parent=5 // pred_region
        %s346 = ssub.s32 %s20, 1
        %s347 = smul.u32 26, %s25
        %p348 = scmp.lt.s32.totalorder %s347, 51
        %s349 = scalar_select %p348, %s347, 51
        %s350 = smul.addr %s349, 4
        %s351 = scalar_lea.vmem %s0, %s350
        %p352 = pneg %p46
        %p353 = pneg %p43
        %p354 = pneg %p67
        %p355 = pneg %p64
        %p356 = pneg %p88
        %p357 = pneg %p85
        %p358 = pneg %p109
        %p359 = pneg %p106
        %p360 = pneg %p130
        %p361 = pneg %p127
        %p362 = pneg %p151
        %p363 = pneg %p148
        %p364 = pneg %p172
        %p365 = pneg %p169
        %p366 = pneg %p193
        %p367 = pneg %p190
        %p368 = pneg %p214
        %p369 = pneg %p211
        %p370 = pneg %p235
        %p371 = pneg %p232
        %p372 = pneg %p256
        %p373 = pneg %p253
        %p374 = pneg %p282
        %p375 = pneg %p279
        %s376 = sand.u32 %s269, 1
        %s377 = scalar_lea.sflag [#allocation3], %s376
        %s378 = sand.u32 %s269, 1
        %s379 = smul.addr %s378, 8
        %s380 = scalar_lea.vmem [#allocation2], %s379
        %s381 = smul.u32 26, %s25
        %p382 = scmp.lt.s32.totalorder %s381, 51
        %s383 = scalar_select %p382, %s381, 51
        %s384 = smul.addr %s383, 4
        %s385 = scalar_lea.vmem %s0, %s384
        %s386 = smul.u32 26, %s25
        %v388 = vld [vmem:[%s385] sm:$0xf]
        %v389 = vld [vmem:[%s385 + $0x4] sm:$0xf]
        %v390 = vld [vmem:[%s385 + $0x8] sm:$0xf]
        %v391 = vld [vmem:[%s385 + $0xc] sm:$0xf]
        %v392 = vld [vmem:[%s385 + $0x10] sm:$0xf]
        %v393 = vld [vmem:[%s385 + $0x14] sm:$0xf]
        %v394 = vld [vmem:[%s385 + $0x18] sm:$0xf]
        %v395 = vld [vmem:[%s385 + $0x1c] sm:$0xf]
        %v396 = vld [vmem:[%s385 + $0x20] sm:$0xf]
        %v397 = vld [vmem:[%s385 + $0x24] sm:$0xf]
        %v398 = vld [vmem:[%s385 + $0x28] sm:$0xf]
        %v399 = vld [vmem:[%s385 + $0x2c] sm:$0xf]
        %v400 = vld [vmem:[%s385 + $0x30] sm:$0xf]
        %v401 = vld [vmem:[%s385 + $0x34] sm:$0xf]
        %v402 = vld [vmem:[%s385 + $0x38] sm:$0xf]
        %v403 = vld [vmem:[%s385 + $0x3c] sm:$0xf]
        %v404 = vld [vmem:[%s385 + $0x40] sm:$0xf]
        %v405 = vld [vmem:[%s385 + $0x44] sm:$0xf]
        %v406 = vld [vmem:[%s385 + $0x48] sm:$0xf]
        %v407 = vld [vmem:[%s385 + $0x4c] sm:$0xf]
        %v408 = vld [vmem:[%s385 + $0x50] sm:$0xf]
        %v409 = vld [vmem:[%s385 + $0x54] sm:$0xf]
        %v410 = vld [vmem:[%s385 + $0x58] sm:$0xf]
        %v411 = vld [vmem:[%s385 + $0x5c] sm:$0xf]
        %v412 = vld [vmem:[%s385 + $0x60] sm:$0xf]
        %v413 = vld [vmem:[%s385 + $0x64] sm:$0xf]
        %v414 = vld [vmem:[%s1] sm:$0xff]
        %v415 = vld [vmem:[%s1 + $0x8] sm:$0xff]
        %v416 = vld [vmem:[%s1 + $0x10] sm:$0xff]
        %v417 = vld [vmem:[%s1 + $0x18] sm:$0xff]
        %v418 = vld [vmem:[%s1 + $0x20] sm:$0xff]
        %v419 = vld [vmem:[%s1 + $0x28] sm:$0xff]
        %v420 = vld [vmem:[%s1 + $0x30] sm:$0xff]
        %v421 = vld [vmem:[%s1 + $0x38] sm:$0xff]
        %v422 = vld [vmem:[%s1 + $0x40] sm:$0xff]
        %v423 = vld [vmem:[%s1 + $0x48] sm:$0xff]
        %v424 = vld [vmem:[%s1 + $0x50] sm:$0xff]
        %v425 = vld [vmem:[%s1 + $0x58] sm:$0xff]
        %v426 = vld [vmem:[%s1 + $0x60] sm:$0xff]
        %v427 = vld [vmem:[%s1 + $0x68] sm:$0xff]
        %v428 = vld [vmem:[%s1 + $0x70] sm:$0xff]
        %v429 = vld [vmem:[%s1 + $0x78] sm:$0xff]
        %v430 = vld [vmem:[%s1 + $0x80] sm:$0xff]
        %v431 = vld [vmem:[%s1 + $0x88] sm:$0xff]
        %v432 = vld [vmem:[%s1 + $0x90] sm:$0xff]
        %v433 = vld [vmem:[%s1 + $0x98] sm:$0xff]
        %v434 = vld [vmem:[%s1 + $0xa0] sm:$0x33]
        %v435 = vld [vmem:[%s1 + $0xa8] sm:$0x33]
        %v462 = vunpack.c.l.b16 %v388
        %v463 = vunpack.c.l.b16 %v389
        %v464 = vunpack.c.l.b16 %v390
        %v465 = vunpack.c.l.b16 %v391
        %v466 = vunpack.c.l.b16 %v392
        %v467 = vunpack.c.l.b16 %v393
        %v468 = vunpack.c.l.b16 %v394
        %v469 = vunpack.c.l.b16 %v395
        %v470 = vunpack.c.l.b16 %v396
        %v471 = vunpack.c.l.b16 %v397
        %v472 = vunpack.c.l.b16 %v398
        %v473 = vunpack.c.l.b16 %v399
        %v474 = vunpack.c.l.b16 %v400
        %v475 = vunpack.c.l.b16 %v401
        %v476 = vunpack.c.l.b16 %v402
        %v477 = vunpack.c.l.b16 %v403
        %v478 = vunpack.c.l.b16 %v404
        %v479 = vunpack.c.l.b16 %v405
        %v480 = vunpack.c.l.b16 %v406
        %v481 = vunpack.c.l.b16 %v407
        %v482 = vunpack.c.l.b16 %v408
        %v483 = vunpack.c.l.b16 %v409
        %v484 = vunpack.c.l.b16 %v410
        %v485 = vunpack.c.l.b16 %v411
        %v486 = vunpack.c.l.b16 %v412
        %v487 = vunpack.c.l.b16 %v413
        %v488 = vpack.c.b16 %v463, %v462
        %v489 = vpack.c.b16 %v465, %v464
        %v490 = vpack.c.b16 %v467, %v466
        %v491 = vpack.c.b16 %v469, %v468
        %v492 = vpack.c.b16 %v471, %v470
        %v493 = vpack.c.b16 %v473, %v472
        %v494 = vpack.c.b16 %v475, %v474
        %v495 = vpack.c.b16 %v477, %v476
        %v496 = vpack.c.b16 %v479, %v478
        %v497 = vpack.c.b16 %v481, %v480
        %v498 = vpack.c.b16 %v483, %v482
        %v499 = vpack.c.b16 %v485, %v484
        %v500 = vpack.c.b16 %v487, %v486
        %v523 = vunpack.c.l.b16 %v414
        %v524 = vunpack.c.h.b16 %v414
        %v525 = vunpack.c.l.b16 %v415
        %v526 = vunpack.c.h.b16 %v415
        %v527 = vunpack.c.l.b16 %v416
        %v528 = vunpack.c.h.b16 %v416
        %v529 = vunpack.c.l.b16 %v417
        %v530 = vunpack.c.h.b16 %v417
        %v531 = vunpack.c.l.b16 %v418
        %v532 = vunpack.c.h.b16 %v418
        %v533 = vunpack.c.l.b16 %v419
        %v534 = vunpack.c.h.b16 %v419
        %v535 = vunpack.c.l.b16 %v420
        %v536 = vunpack.c.h.b16 %v420
        %v537 = vunpack.c.l.b16 %v421
        %v538 = vunpack.c.h.b16 %v421
        %v539 = vunpack.c.l.b16 %v422
        %v540 = vunpack.c.h.b16 %v422
        %v541 = vunpack.c.l.b16 %v423
        %v542 = vunpack.c.h.b16 %v423
        %v543 = vunpack.c.l.b16 %v424
        %v544 = vunpack.c.h.b16 %v424
        %v545 = vunpack.c.l.b16 %v425
        %v546 = vunpack.c.h.b16 %v425
        %v547 = vunpack.c.l.b16 %v426
        %v548 = vunpack.c.h.b16 %v426
        %v549 = vunpack.c.l.b16 %v427
        %v550 = vunpack.c.h.b16 %v427
        %v551 = vunpack.c.l.b16 %v428
        %v552 = vunpack.c.h.b16 %v428
        %v553 = vunpack.c.l.b16 %v429
        %v554 = vunpack.c.h.b16 %v429
        %v555 = vunpack.c.l.b16 %v430
        %v556 = vunpack.c.h.b16 %v430
        %v557 = vunpack.c.l.b16 %v431
        %v558 = vunpack.c.h.b16 %v431
        %v559 = vunpack.c.l.b16 %v432
        %v560 = vunpack.c.h.b16 %v432
        %v561 = vunpack.c.l.b16 %v433
        %v562 = vunpack.c.h.b16 %v433
        %v563 = vunpack.c.l.b16 %v434
        %v564 = vunpack.c.h.b16 %v434
        %v565 = vunpack.c.l.b16 %v435
        %v566 = vunpack.c.h.b16 %v435
        %v567 = vpack.c.b16 %v527, %v523
        %v568 = vpack.c.b16 %v528, %v524
        %v569 = vpack.c.b16 %v529, %v525
        %v570 = vpack.c.b16 %v530, %v526
        %v571 = vpack.c.b16 %v535, %v531
        %v572 = vpack.c.b16 %v536, %v532
        %v573 = vpack.c.b16 %v537, %v533
        %v574 = vpack.c.b16 %v538, %v534
        %v575 = vpack.c.b16 %v543, %v539
        %v576 = vpack.c.b16 %v544, %v540
        %v577 = vpack.c.b16 %v545, %v541
        %v578 = vpack.c.b16 %v546, %v542
        %v579 = vpack.c.b16 %v551, %v547
        %v580 = vpack.c.b16 %v552, %v548
        %v581 = vpack.c.b16 %v553, %v549
        %v582 = vpack.c.b16 %v554, %v550
        %v583 = vpack.c.b16 %v559, %v555
        %v584 = vpack.c.b16 %v560, %v556
        %v585 = vpack.c.b16 %v561, %v557
        %v586 = vpack.c.b16 %v562, %v558
        %v587 = vpack.c.b16 %v563, %v563
        %v588 = vpack.c.b16 %v564, %v564
        %v589 = vpack.c.b16 %v565, %v565
        %v590 = vpack.c.b16 %v566, %v566
        %vm611 = vcmask 687104
        %v613 = vsel %vm611, %v488, 0
        %v616 = vsel %vm611, %v489, 0
        %v619 = vsel %vm611, %v490, 0
        %v622 = vsel %vm611, %v491, 0
        %v625 = vsel %vm611, %v492, 0
        %v628 = vsel %vm611, %v493, 0
        %v631 = vsel %vm611, %v494, 0
        %v634 = vsel %vm611, %v495, 0
        %v637 = vsel %vm611, %v496, 0
        %v640 = vsel %vm611, %v497, 0
        %v643 = vsel %vm611, %v498, 0
        %v646 = vsel %vm611, %v499, 0
        %v649 = vsel %vm611, %v500, 0
        %vm651 = vcmask 1041408
        %v653 = vsel %vm651, %v587, 0
        %v656 = vsel %vm651, %v588, 0
        %v659 = vsel %vm651, %v589, 0
        %v662 = vsel %vm651, %v590, 0
        %664 = vmatprep.subr.bf16.mxu0 %v568
        %665 = vmatpush1.bf16.msra.mxu0 %v567
        %666 = vmatprep.subr.bf16.mxu0 %v572
        %667 = vmatpush1.bf16.msra.mxu0 %v571
        %668 = vmatprep.subr.bf16.mxu0 %v576
        %669 = vmatpush1.bf16.msra.mxu0 %v575
        %670 = vmatprep.subr.bf16.mxu0 %v580
        %671 = vmatpush1.bf16.msra.mxu0 %v579
        %672 = vmatprep.subr.bf16.mxu0 %v584
        %673 = vmatpush1.bf16.msra.mxu0 %v583
        %674 = vmatprep.subr.bf16.mxu0 %v656
        %675 = vmatpush1.bf16.msra.mxu0 %v653
        %676 = vmatprep.subr.bf16.mxu0 0
        %677 = vmatpush1.bf16.msra.mxu0 0
        %678 = vmatprep.subr.bf16.mxu0 0
        %679 = vmatpush1.bf16.msra.mxu0 0
        %680 = vmatprep.subr.bf16.mxu0 0
        %681 = vmatpush1.bf16.msra.mxu0 0
        %682 = vmatprep.subr.bf16.mxu0 0
        %683 = vmatpush1.bf16.msra.mxu0 0
        %684 = vmatprep.subr.bf16.mxu0 0
        %685 = vmatpush1.bf16.msra.mxu0 0
        %686 = vmatprep.subr.bf16.mxu0 0
        %687 = vmatpush1.bf16.msra.mxu0 0
        %688 = vmatprep.subr.bf16.mxu0 0
        %689 = vmatpush1.bf16.msra.mxu0 0
        %690 = vmatprep.subr.bf16.mxu0 0
        %691 = vmatpush1.bf16.msra.mxu0 0
        %692 = vmatprep.subr.bf16.mxu0 0
        %693 = vmatpush1.bf16.msra.mxu0 0
        %694 = vmatprep.subr.bf16.mxu0 0
        %695 = vmatpush1.bf16.msra.mxu0 0
        %696 = vmatprep.mubr.bf16.mxu0 0
        %697 = vmatmul.mubr.bf16.gmra.mrb[0].mxu0 %v613
        %v698 = vpop.f32.mrb[0].mxu0
        %v699 = vadd.f32 0.0, %v698
        %v700 = vpop.f32.mrb[0].mxu0
        %v701 = vadd.f32 0.0, %v700
        %v702 = vpop.f32.mrb[0].mxu0
        %v703 = vadd.f32 0.0, %v702
        %v704 = vpop.f32.mrb[0].mxu0
        %v705 = vadd.f32 0.0, %v704
        %706 = vmatprep.mubr.bf16.mxu0 0
        %707 = vmatmul.mubr.bf16.gmra.mrb[0].mxu0 %v616
        %v708 = vpop.f32.mrb[0].mxu0
        %v709 = vadd.f32 0.0, %v708
        %v710 = vpop.f32.mrb[0].mxu0
        %v711 = vadd.f32 0.0, %v710
        %v712 = vpop.f32.mrb[0].mxu0
        %v713 = vadd.f32 0.0, %v712
        %v714 = vpop.f32.mrb[0].mxu0
        %v715 = vadd.f32 0.0, %v714
        %716 = vmatprep.mubr.bf16.mxu0 0
        %717 = vmatmul.mubr.bf16.gmra.mrb[0].mxu0 %v619
        %v718 = vpop.f32.mrb[0].mxu0
        %v719 = vadd.f32 0.0, %v718
        %v720 = vpop.f32.mrb[0].mxu0
        %v721 = vadd.f32 0.0, %v720
        %v722 = vpop.f32.mrb[0].mxu0
        %v723 = vadd.f32 0.0, %v722
        %v724 = vpop.f32.mrb[0].mxu0
        %v725 = vadd.f32 0.0, %v724
        %726 = vmatprep.mubr.bf16.mxu0 0
        %727 = vmatmul.mubr.bf16.gmra.mrb[0].mxu0 %v622
        %v728 = vpop.f32.mrb[0].mxu0
        %v729 = vpop.f32.mrb[0].mxu0
        %v730 = vpop.f32.mrb[0].mxu0
        %v731 = vadd.f32 0.0, %v730
        %v732 = vpop.f32.mrb[0].mxu0
        %v733 = vadd.f32 0.0, %v732
        %734 = vmatprep.mubr.bf16.mxu0 0
        %735 = vmatmul.mubr.bf16.gmra.mrb[0].mxu0 %v625
        %v736 = vpop.f32.mrb[0].mxu0
        %v737 = vadd.f32 0.0, %v736
        %v738 = vpop.f32.mrb[0].mxu0
        %v739 = vadd.f32 0.0, %v738
        %v740 = vpop.f32.mrb[0].mxu0
        %v741 = vadd.f32 0.0, %v740
        %v742 = vpop.f32.mrb[0].mxu0
        %v743 = vadd.f32 0.0, %v742
        %744 = vmatprep.mubr.bf16.mxu0 0
        %745 = vmatmul.mubr.bf16.gmra.mrb[0].mxu0 %v628
        %v746 = vpop.f32.mrb[0].mxu0
        %v747 = vadd.f32 0.0, %v746
        %v748 = vpop.f32.mrb[0].mxu0
        %v749 = vadd.f32 0.0, %v748
        %v750 = vpop.f32.mrb[0].mxu0
        %v751 = vadd.f32 0.0, %v750
        %v752 = vpop.f32.mrb[0].mxu0
        %v753 = vadd.f32 0.0, %v752
        %754 = vmatprep.mubr.bf16.mxu0 0
        %755 = vmatmul.mubr.bf16.gmra.mrb[0].mxu0 %v631
        %v756 = vpop.f32.mrb[0].mxu0
        %v757 = vadd.f32 0.0, %v756
        %v758 = vpop.f32.mrb[0].mxu0
        %v759 = vadd.f32 0.0, %v758
        %v760 = vpop.f32.mrb[0].mxu0
        %v761 = vpop.f32.mrb[0].mxu0
        %762 = vmatprep.mubr.bf16.mxu0 0
        %763 = vmatmul.mubr.bf16.gmra.mrb[0].mxu0 %v634
        %v764 = vpop.f32.mrb[0].mxu0
        %v765 = vadd.f32 0.0, %v764
        %v766 = vpop.f32.mrb[0].mxu0
        %v767 = vadd.f32 0.0, %v766
        %v768 = vpop.f32.mrb[0].mxu0
        %v769 = vadd.f32 0.0, %v768
        %v770 = vpop.f32.mrb[0].mxu0
        %v771 = vadd.f32 0.0, %v770
        %772 = vmatprep.mubr.bf16.mxu0 0
        %773 = vmatmul.mubr.bf16.gmra.mrb[0].mxu0 %v637
        %v774 = vpop.f32.mrb[0].mxu0
        %v775 = vadd.f32 0.0, %v774
        %v776 = vpop.f32.mrb[0].mxu0
        %v777 = vadd.f32 0.0, %v776
        %v778 = vpop.f32.mrb[0].mxu0
        %v779 = vadd.f32 0.0, %v778
        %v780 = vpop.f32.mrb[0].mxu0
        %v781 = vadd.f32 0.0, %v780
        %782 = vmatprep.mubr.bf16.mxu0 0
        %783 = vmatmul.mubr.bf16.gmra.mrb[0].mxu0 %v640
        %v784 = vpop.f32.mrb[0].mxu0
        %v785 = vadd.f32 0.0, %v784
        %v786 = vpop.f32.mrb[0].mxu0
        %v787 = vadd.f32 0.0, %v786
        %v788 = vpop.f32.mrb[0].mxu0
        %v789 = vadd.f32 0.0, %v788
        %v790 = vpop.f32.mrb[0].mxu0
        %v791 = vadd.f32 0.0, %v790
        %792 = vmatprep.mubr.bf16.mxu0 0
        %793 = vmatmul.mubr.bf16.gmra.mrb[0].mxu0 %v643
        %v794 = vpop.f32.mrb[0].mxu0
        %v795 = vadd.f32 0.0, %v794
        %v796 = vpop.f32.mrb[0].mxu0
        %v797 = vadd.f32 0.0, %v796
        %v798 = vpop.f32.mrb[0].mxu0
        %v799 = vadd.f32 0.0, %v798
        %v800 = vpop.f32.mrb[0].mxu0
        %v801 = vadd.f32 0.0, %v800
        %802 = vmatprep.mubr.bf16.mxu0 0
        %803 = vmatmul.mubr.bf16.gmra.mrb[0].mxu0 %v646
        %v804 = vpop.f32.mrb[0].mxu0
        %v805 = vadd.f32 0.0, %v804
        %v806 = vpop.f32.mrb[0].mxu0
        %v807 = vadd.f32 0.0, %v806
        %v808 = vpop.f32.mrb[0].mxu0
        %v809 = vadd.f32 0.0, %v808
        %v810 = vpop.f32.mrb[0].mxu0
        %v811 = vadd.f32 0.0, %v810
        %812 = vmatprep.mubr.bf16.mxu0 0
        %813 = vmatmul.mubr.bf16.gmra.mrb[0].mxu0 %v649
        %v814 = vpop.f32.mrb[0].mxu0
        %v815 = vadd.f32 0.0, %v814
        %v816 = vpop.f32.mrb[0].mxu0
        %v817 = vadd.f32 0.0, %v816
        %v818 = vpop.f32.mrb[0].mxu0
        %v819 = vadd.f32 0.0, %v818
        %v820 = vpop.f32.mrb[0].mxu0
        %v821 = vadd.f32 0.0, %v820
        %822 = vdwg.mxu0
        %823 = vmatprep.subr.bf16.mxu0 %v570
        %824 = vmatpush1.bf16.msra.mxu0 %v569
        %825 = vmatprep.subr.bf16.mxu0 %v574
        %826 = vmatpush1.bf16.msra.mxu0 %v573
        %827 = vmatprep.subr.bf16.mxu0 %v578
        %828 = vmatpush1.bf16.msra.mxu0 %v577
        %829 = vmatprep.subr.bf16.mxu0 %v582
        %830 = vmatpush1.bf16.msra.mxu0 %v581
        %831 = vmatprep.subr.bf16.mxu0 %v586
        %832 = vmatpush1.bf16.msra.mxu0 %v585
        %833 = vmatprep.subr.bf16.mxu0 %v662
        %834 = vmatpush1.bf16.msra.mxu0 %v659
        %835 = vmatprep.subr.bf16.mxu0 0
        %836 = vmatpush1.bf16.msra.mxu0 0
        %837 = vmatprep.subr.bf16.mxu0 0
        %838 = vmatpush1.bf16.msra.mxu0 0
        %839 = vmatprep.subr.bf16.mxu0 0
        %840 = vmatpush1.bf16.msra.mxu0 0
        %841 = vmatprep.subr.bf16.mxu0 0
        %842 = vmatpush1.bf16.msra.mxu0 0
        %843 = vmatprep.subr.bf16.mxu0 0
        %844 = vmatpush1.bf16.msra.mxu0 0
        %845 = vmatprep.subr.bf16.mxu0 0
        %846 = vmatpush1.bf16.msra.mxu0 0
        %847 = vmatprep.subr.bf16.mxu0 0
        %848 = vmatpush1.bf16.msra.mxu0 0
        %849 = vmatprep.subr.bf16.mxu0 0
        %850 = vmatpush1.bf16.msra.mxu0 0
        %851 = vmatprep.subr.bf16.mxu0 0
        %852 = vmatpush1.bf16.msra.mxu0 0
        %853 = vmatprep.subr.bf16.mxu0 0
        %854 = vmatpush1.bf16.msra.mxu0 0
        %855 = vmatprep.mubr.bf16.mxu0 0
        %856 = vmatmul.mubr.bf16.gmra.mrb[0].mxu0 %v613
        %v857 = vpop.f32.mrb[0].mxu0
        %v858 = vadd.f32 0.0, %v857
        %v859 = vpop.f32.mrb[0].mxu0
        %v860 = vadd.f32 0.0, %v859
        %v861 = vpop.f32.mrb[0].mxu0
        %v862 = vadd.f32 0.0, %v861
        %v863 = vpop.f32.mrb[0].mxu0
        %v864 = vadd.f32 0.0, %v863
        %865 = vmatprep.mubr.bf16.mxu0 0
        %866 = vmatmul.mubr.bf16.gmra.mrb[0].mxu0 %v616
        %v867 = vpop.f32.mrb[0].mxu0
        %v868 = vadd.f32 0.0, %v867
        %v869 = vpop.f32.mrb[0].mxu0
        %v870 = vadd.f32 0.0, %v869
        %v871 = vpop.f32.mrb[0].mxu0
        %v872 = vadd.f32 0.0, %v871
        %v873 = vpop.f32.mrb[0].mxu0
        %v874 = vadd.f32 0.0, %v873
        %875 = vmatprep.mubr.bf16.mxu0 0
        %876 = vmatmul.mubr.bf16.gmra.mrb[0].mxu0 %v619
        %v877 = vpop.f32.mrb[0].mxu0
        %v878 = vadd.f32 0.0, %v877
        %v879 = vpop.f32.mrb[0].mxu0
        %v880 = vadd.f32 0.0, %v879
        %v881 = vpop.f32.mrb[0].mxu0
        %v882 = vadd.f32 0.0, %v881
        %v883 = vpop.f32.mrb[0].mxu0
        %v884 = vadd.f32 0.0, %v883
        %885 = vmatprep.mubr.bf16.mxu0 0
        %886 = vmatmul.mubr.bf16.gmra.mrb[0].mxu0 %v622
        %v887 = vpop.f32.mrb[0].mxu0
        %v888 = vpop.f32.mrb[0].mxu0
        %v889 = vpop.f32.mrb[0].mxu0
        %v890 = vadd.f32 0.0, %v889
        %v891 = vpop.f32.mrb[0].mxu0
        %v892 = vadd.f32 0.0, %v891
        %893 = vmatprep.mubr.bf16.mxu0 0
        %894 = vmatmul.mubr.bf16.gmra.mrb[0].mxu0 %v625
        %v895 = vpop.f32.mrb[0].mxu0
        %v896 = vadd.f32 0.0, %v895
        %v897 = vpop.f32.mrb[0].mxu0
        %v898 = vadd.f32 0.0, %v897
        %v899 = vpop.f32.mrb[0].mxu0
        %v900 = vadd.f32 0.0, %v899
        %v901 = vpop.f32.mrb[0].mxu0
        %v902 = vadd.f32 0.0, %v901
        %903 = vmatprep.mubr.bf16.mxu0 0
        %904 = vmatmul.mubr.bf16.gmra.mrb[0].mxu0 %v628
        %v905 = vpop.f32.mrb[0].mxu0
        %v906 = vadd.f32 0.0, %v905
        %v907 = vpop.f32.mrb[0].mxu0
        %v908 = vadd.f32 0.0, %v907
        %v909 = vpop.f32.mrb[0].mxu0
        %v910 = vadd.f32 0.0, %v909
        %v911 = vpop.f32.mrb[0].mxu0
        %v912 = vadd.f32 0.0, %v911
        %913 = vmatprep.mubr.bf16.mxu0 0
        %914 = vmatmul.mubr.bf16.gmra.mrb[0].mxu0 %v631
        %v915 = vpop.f32.mrb[0].mxu0
        %v916 = vadd.f32 0.0, %v915
        %v917 = vpop.f32.mrb[0].mxu0
        %v918 = vadd.f32 0.0, %v917
        %v919 = vpop.f32.mrb[0].mxu0
        %v920 = vpop.f32.mrb[0].mxu0
        %921 = vmatprep.mubr.bf16.mxu0 0
        %922 = vmatmul.mubr.bf16.gmra.mrb[0].mxu0 %v634
        %v923 = vpop.f32.mrb[0].mxu0
        %v924 = vadd.f32 0.0, %v923
        %v925 = vpop.f32.mrb[0].mxu0
        %v926 = vadd.f32 0.0, %v925
        %v927 = vpop.f32.mrb[0].mxu0
        %v928 = vadd.f32 0.0, %v927
        %v929 = vpop.f32.mrb[0].mxu0
        %v930 = vadd.f32 0.0, %v929
        %931 = vmatprep.mubr.bf16.mxu0 0
        %932 = vmatmul.mubr.bf16.gmra.mrb[0].mxu0 %v637
        %v933 = vpop.f32.mrb[0].mxu0
        %v934 = vadd.f32 0.0, %v933
        %v935 = vpop.f32.mrb[0].mxu0
        %v936 = vadd.f32 0.0, %v935
        %v937 = vpop.f32.mrb[0].mxu0
        %v938 = vadd.f32 0.0, %v937
        %v939 = vpop.f32.mrb[0].mxu0
        %v940 = vadd.f32 0.0, %v939
        %941 = vmatprep.mubr.bf16.mxu0 0
        %942 = vmatmul.mubr.bf16.gmra.mrb[0].mxu0 %v640
        %v943 = vpop.f32.mrb[0].mxu0
        %v944 = vadd.f32 0.0, %v943
        %v945 = vpop.f32.mrb[0].mxu0
        %v946 = vadd.f32 0.0, %v945
        %v947 = vpop.f32.mrb[0].mxu0
        %v948 = vadd.f32 0.0, %v947
        %v949 = vpop.f32.mrb[0].mxu0
        %v950 = vadd.f32 0.0, %v949
        %951 = vmatprep.mubr.bf16.mxu0 0
        %952 = vmatmul.mubr.bf16.gmra.mrb[0].mxu0 %v643
        %v953 = vpop.f32.mrb[0].mxu0
        %v954 = vadd.f32 0.0, %v953
        %v955 = vpop.f32.mrb[0].mxu0
        %v956 = vadd.f32 0.0, %v955
        %v957 = vpop.f32.mrb[0].mxu0
        %v958 = vadd.f32 0.0, %v957
        %v959 = vpop.f32.mrb[0].mxu0
        %v960 = vadd.f32 0.0, %v959
        %961 = vmatprep.mubr.bf16.mxu0 0
        %962 = vmatmul.mubr.bf16.gmra.mrb[0].mxu0 %v646
        %v963 = vpop.f32.mrb[0].mxu0
        %v964 = vadd.f32 0.0, %v963
        %v965 = vpop.f32.mrb[0].mxu0
        %v966 = vadd.f32 0.0, %v965
        %v967 = vpop.f32.mrb[0].mxu0
        %v968 = vadd.f32 0.0, %v967
        %v969 = vpop.f32.mrb[0].mxu0
        %v970 = vadd.f32 0.0, %v969
        %971 = vmatprep.mubr.bf16.mxu0 0
        %972 = vmatmul.mubr.bf16.gmra.mrb[0].mxu0 %v649
        %v973 = vpop.f32.mrb[0].mxu0
        %v974 = vadd.f32 0.0, %v973
        %v975 = vpop.f32.mrb[0].mxu0
        %v976 = vadd.f32 0.0, %v975
        %v977 = vpop.f32.mrb[0].mxu0
        %v978 = vadd.f32 0.0, %v977
        %v979 = vpop.f32.mrb[0].mxu0
        %v980 = vadd.f32 0.0, %v979
        %981 = vdwg.mxu0
        %v982 = vmax.f32 %v699, %v731
        %v983 = vmax.f32 %v701, %v733
        %v984 = vmax.f32 %v858, %v890
        %v985 = vmax.f32 %v860, %v892
        %v986 = vmax.f32 %v703, %v737
        %v987 = vmax.f32 %v705, %v739
        %v988 = vmax.f32 %v862, %v896
        %v989 = vmax.f32 %v864, %v898
        %v990 = vmax.f32 %v709, %v741
        %v991 = vmax.f32 %v711, %v743
        %v992 = vmax.f32 %v868, %v900
        %v993 = vmax.f32 %v870, %v902
        %v994 = vmax.f32 %v713, %v747
        %v995 = vmax.f32 %v715, %v749
        %v996 = vmax.f32 %v872, %v906
        %v997 = vmax.f32 %v874, %v908
        %v998 = vmax.f32 %v719, %v751
        %v999 = vmax.f32 %v721, %v753
        %v1000 = vmax.f32 %v878, %v910
        %v1001 = vmax.f32 %v880, %v912
        %v1002 = vmax.f32 %v723, %v757
        %v1003 = vmax.f32 %v725, %v759
        %v1004 = vmax.f32 %v882, %v916
        %v1005 = vmax.f32 %v884, %v918
        %v1006 = vmax.f32 %v982, %v984
        %v1007 = vmax.f32 %v983, %v985
        %v1008 = vmax.f32 %v986, %v988
        %v1009 = vmax.f32 %v987, %v989
        %v1010 = vmax.f32 %v990, %v992
        %v1011 = vmax.f32 %v991, %v993
        %v1012 = vmax.f32 %v994, %v996
        %v1013 = vmax.f32 %v995, %v997
        %v1014 = vmax.f32 %v998, %v1000
        %v1015 = vmax.f32 %v999, %v1001
        %v1016 = vmax.f32 %v1002, %v1004
        %v1017 = vmax.f32 %v1003, %v1005
        %v1018 = vld [vmem:[%s2] sm:$0x3]
        %v1020 = vlaneseq
        %v1021 = vshrl.u32 %v1020, 7
        %v1022 = vsub.s32 0, %v1021
        %v1023 = vrot.slane %v1018, %v1022
        %v1024 = vlaneseq
        %v1025 = vshrl.u32 %v1024, 7
        %v1026 = vsub.s32 1, %v1025
        %v1027 = vrot.slane %v1018, %v1026
        %v1030 = vadd.f32 %v1006, %v1023
        %v1031 = vadd.f32 %v1007, %v1027
        %v1032 = vadd.f32 %v1008, %v1023
        %v1033 = vadd.f32 %v1009, %v1027
        %v1034 = vadd.f32 %v1010, %v1023
        %v1035 = vadd.f32 %v1011, %v1027
        %v1036 = vadd.f32 %v1012, %v1023
        %v1037 = vadd.f32 %v1013, %v1027
        %v1038 = vadd.f32 %v1014, %v1023
        %v1039 = vadd.f32 %v1015, %v1027
        %v1040 = vadd.f32 %v1016, %v1023
        %v1041 = vadd.f32 %v1017, %v1027
        %v1042 = vmax.f32 %v1030, 0.0
        %v1043 = vmax.f32 %v1031, 0.0
        %v1044 = vmax.f32 %v1032, 0.0
        %v1045 = vmax.f32 %v1033, 0.0
        %v1046 = vmax.f32 %v1034, 0.0
        %v1047 = vmax.f32 %v1035, 0.0
        %v1048 = vmax.f32 %v1036, 0.0
        %v1049 = vmax.f32 %v1037, 0.0
        %v1050 = vmax.f32 %v1038, 0.0
        %v1051 = vmax.f32 %v1039, 0.0
        %v1052 = vmax.f32 %v1040, 0.0
        %v1053 = vmax.f32 %v1041, 0.0
        %v1054 = vmax.f32 %v765, %v795
        %v1055 = vmax.f32 %v767, %v797
        %v1056 = vmax.f32 %v924, %v954
        %v1057 = vmax.f32 %v926, %v956
        %v1058 = vmax.f32 %v769, %v799
        %v1059 = vmax.f32 %v771, %v801
        %v1060 = vmax.f32 %v928, %v958
        %v1061 = vmax.f32 %v930, %v960
        %v1062 = vmax.f32 %v775, %v805
        %v1063 = vmax.f32 %v777, %v807
        %v1064 = vmax.f32 %v934, %v964
        %v1065 = vmax.f32 %v936, %v966
        %v1066 = vmax.f32 %v779, %v809
        %v1067 = vmax.f32 %v781, %v811
        %v1068 = vmax.f32 %v938, %v968
        %v1069 = vmax.f32 %v940, %v970
        %v1070 = vmax.f32 %v785, %v815
        %v1071 = vmax.f32 %v787, %v817
        %v1072 = vmax.f32 %v944, %v974
        %v1073 = vmax.f32 %v946, %v976
        %v1074 = vmax.f32 %v789, %v819
        %v1075 = vmax.f32 %v791, %v821
        %v1076 = vmax.f32 %v948, %v978
        %v1077 = vmax.f32 %v950, %v980
        %v1078 = vmax.f32 %v1054, %v1056
        %v1079 = vmax.f32 %v1055, %v1057
        %v1080 = vmax.f32 %v1058, %v1060
        %v1081 = vmax.f32 %v1059, %v1061
        %v1082 = vmax.f32 %v1062, %v1064
        %v1083 = vmax.f32 %v1063, %v1065
        %v1084 = vmax.f32 %v1066, %v1068
        %v1085 = vmax.f32 %v1067, %v1069
        %v1086 = vmax.f32 %v1070, %v1072
        %v1087 = vmax.f32 %v1071, %v1073
        %v1088 = vmax.f32 %v1074, %v1076
        %v1089 = vmax.f32 %v1075, %v1077
        %v1090 = vadd.f32 %v1078, %v1023
        %v1091 = vadd.f32 %v1079, %v1027
        %v1092 = vadd.f32 %v1080, %v1023
        %v1093 = vadd.f32 %v1081, %v1027
        %v1094 = vadd.f32 %v1082, %v1023
        %v1095 = vadd.f32 %v1083, %v1027
        %v1096 = vadd.f32 %v1084, %v1023
        %v1097 = vadd.f32 %v1085, %v1027
        %v1098 = vadd.f32 %v1086, %v1023
        %v1099 = vadd.f32 %v1087, %v1027
        %v1100 = vadd.f32 %v1088, %v1023
        %v1101 = vadd.f32 %v1089, %v1027
        %v1102 = vmax.f32 %v1090, 0.0
        %v1103 = vmax.f32 %v1091, 0.0
        %v1104 = vmax.f32 %v1092, 0.0
        %v1105 = vmax.f32 %v1093, 0.0
        %v1106 = vmax.f32 %v1094, 0.0
        %v1107 = vmax.f32 %v1095, 0.0
        %v1108 = vmax.f32 %v1096, 0.0
        %v1109 = vmax.f32 %v1097, 0.0
        %v1110 = vmax.f32 %v1098, 0.0
        %v1111 = vmax.f32 %v1099, 0.0
        %v1112 = vmax.f32 %v1100, 0.0
        %v1113 = vmax.f32 %v1101, 0.0
        %v1114 = vpack.c.bf16 %v1044, %v1042
        %v1115 = vpack.c.bf16 %v1045, %v1043
        %v1116 = vpack.c.bf16 %v1048, %v1046
        %v1117 = vpack.c.bf16 %v1049, %v1047
        %v1118 = vpack.c.bf16 %v1052, %v1050
        %v1119 = vpack.c.bf16 %v1053, %v1051
        %v1120 = vpack.c.bf16 %v1104, %v1102
        %v1121 = vpack.c.bf16 %v1105, %v1103
        %v1122 = vpack.c.bf16 %v1108, %v1106
        %v1123 = vpack.c.bf16 %v1109, %v1107
        %v1124 = vpack.c.bf16 %v1112, %v1110
        %v1125 = vpack.c.bf16 %v1113, %v1111
        %v1126 = vld [vmem:[%s3] sm:$0xff]
        %v1127 = vld [vmem:[%s3 + $0x8] sm:$0xff]
        %v1128 = vld [vmem:[%s3 + $0x10] sm:$0xff]
        %v1129 = vld [vmem:[%s3 + $0x18] sm:$0xff]
        %v1130 = vld [vmem:[%s3 + $0x20] sm:$0xff]
        %v1131 = vld [vmem:[%s3 + $0x28] sm:$0xff]
        %v1132 = vld [vmem:[%s3 + $0x30] sm:$0xff]
        %v1133 = vld [vmem:[%s3 + $0x38] sm:$0xff]
        %v1134 = vld [vmem:[%s3 + $0x40] sm:$0xff]
        %v1135 = vld [vmem:[%s3 + $0x48] sm:$0xff]
        %v1136 = vld [vmem:[%s3 + $0x50] sm:$0xff]
        %v1137 = vld [vmem:[%s3 + $0x58] sm:$0xff]
        %v1138 = vld [vmem:[%s3 + $0x60] sm:$0xff]
        %v1139 = vld [vmem:[%s3 + $0x68] sm:$0xff]
        %v1140 = vld [vmem:[%s3 + $0x70] sm:$0xff]
        %v1141 = vld [vmem:[%s3 + $0x78] sm:$0xff]
        %v1142 = vld [vmem:[%s3 + $0x80] sm:$0xff]
        %v1143 = vld [vmem:[%s3 + $0x88] sm:$0xff]
        %v1144 = vld [vmem:[%s3 + $0x90] sm:$0xff]
        %v1145 = vld [vmem:[%s3 + $0x98] sm:$0xff]
        %v1146 = vld [vmem:[%s3 + $0xa0] sm:$0xff]
        %v1147 = vld [vmem:[%s3 + $0xa8] sm:$0xff]
        %v1148 = vld [vmem:[%s3 + $0xb0] sm:$0xff]
        %v1149 = vld [vmem:[%s3 + $0xb8] sm:$0xff]
        %v1150 = vld [vmem:[%s3 + $0xc0] sm:$0xff]
        %v1151 = vld [vmem:[%s3 + $0xc8] sm:$0xff]
        %s1152 = scalar_lea.vmem %s3, 208
        %v1153 = vld [vmem:[%s1152] sm:$0xff]
        %v1154 = vld [vmem:[%s1152 + $0x8] sm:$0xff]
        %v1155 = vld [vmem:[%s1152 + $0x10] sm:$0xff]
        %v1156 = vld [vmem:[%s1152 + $0x18] sm:$0xff]
        %v1157 = vld [vmem:[%s1152 + $0x20] sm:$0xff]
        %v1158 = vld [vmem:[%s1152 + $0x28] sm:$0xff]
        %v1159 = vld [vmem:[%s1152 + $0x30] sm:$0xff]
        %v1160 = vld [vmem:[%s1152 + $0x38] sm:$0xff]
        %v1161 = vld [vmem:[%s1152 + $0x40] sm:$0xff]
        %v1162 = vld [vmem:[%s1152 + $0x48] sm:$0xff]
        %v1163 = vld [vmem:[%s1152 + $0x50] sm:$0xff]
        %v1164 = vld [vmem:[%s1152 + $0x58] sm:$0xff]
        %v1165 = vld [vmem:[%s1152 + $0x60] sm:$0xff]
        %v1166 = vld [vmem:[%s1152 + $0x68] sm:$0xff]
        %v1167 = vld [vmem:[%s1152 + $0x70] sm:$0xff]
        %v1168 = vld [vmem:[%s1152 + $0x78] sm:$0xff]
        %v1169 = vld [vmem:[%s1152 + $0x80] sm:$0xff]
        %v1170 = vld [vmem:[%s1152 + $0x88] sm:$0xff]
        %v1171 = vld [vmem:[%s1152 + $0x90] sm:$0xff]
        %v1172 = vld [vmem:[%s1152 + $0x98] sm:$0xff]
        %v1173 = vld [vmem:[%s1152 + $0xa0] sm:$0xff]
        %v1174 = vld [vmem:[%s1152 + $0xa8] sm:$0xff]
        %v1175 = vld [vmem:[%s1152 + $0xb0] sm:$0xff]
        %v1176 = vld [vmem:[%s1152 + $0xb8] sm:$0xff]
        %v1177 = vld [vmem:[%s1152 + $0xc0] sm:$0xff]
        %v1178 = vld [vmem:[%s1152 + $0xc8] sm:$0xff]
        %s1179 = scalar_lea.vmem %s3, 416
        %v1180 = vld [vmem:[%s1179] sm:$0xff]
        %v1181 = vld [vmem:[%s1179 + $0x8] sm:$0xff]
        %v1182 = vld [vmem:[%s1179 + $0x10] sm:$0xff]
        %v1183 = vld [vmem:[%s1179 + $0x18] sm:$0xff]
        %v1184 = vld [vmem:[%s1179 + $0x20] sm:$0xff]
        %v1185 = vld [vmem:[%s1179 + $0x28] sm:$0xff]
        %v1186 = vld [vmem:[%s1179 + $0x30] sm:$0xff]
        %v1187 = vld [vmem:[%s1179 + $0x38] sm:$0xff]
        %v1188 = vld [vmem:[%s1179 + $0x40] sm:$0xff]
        %v1189 = vld [vmem:[%s1179 + $0x48] sm:$0xff]
        %v1190 = vld [vmem:[%s1179 + $0x50] sm:$0xff]
        %v1191 = vld [vmem:[%s1179 + $0x58] sm:$0xff]
        %v1192 = vld [vmem:[%s1179 + $0x60] sm:$0xff]
        %v1193 = vld [vmem:[%s1179 + $0x68] sm:$0xff]
        %v1194 = vld [vmem:[%s1179 + $0x70] sm:$0xff]
        %v1195 = vld [vmem:[%s1179 + $0x78] sm:$0xff]
        %v1196 = vld [vmem:[%s1179 + $0x80] sm:$0xff]
        %v1197 = vld [vmem:[%s1179 + $0x88] sm:$0xff]
        %v1198 = vld [vmem:[%s1179 + $0x90] sm:$0xff]
        %v1199 = vld [vmem:[%s1179 + $0x98] sm:$0xff]
        %v1200 = vld [vmem:[%s1179 + $0xa0] sm:$0xff]
        %v1201 = vld [vmem:[%s1179 + $0xa8] sm:$0xff]
        %v1202 = vld [vmem:[%s1179 + $0xb0] sm:$0xff]
        %v1203 = vld [vmem:[%s1179 + $0xb8] sm:$0xff]
        %v1204 = vld [vmem:[%s1179 + $0xc0] sm:$0xff]
        %v1205 = vld [vmem:[%s1179 + $0xc8] sm:$0xff]
        %v1232 = vunpack.c.l.b16 %v1153
        %v1233 = vunpack.c.h.b16 %v1153
        %v1234 = vunpack.c.l.b16 %v1154
        %v1235 = vunpack.c.h.b16 %v1154
        %v1236 = vunpack.c.l.b16 %v1155
        %v1237 = vunpack.c.h.b16 %v1155
        %v1238 = vunpack.c.l.b16 %v1156
        %v1239 = vunpack.c.h.b16 %v1156
        %v1240 = vunpack.c.l.b16 %v1157
        %v1241 = vunpack.c.h.b16 %v1157
        %v1242 = vunpack.c.l.b16 %v1158
        %v1243 = vunpack.c.h.b16 %v1158
        %v1244 = vunpack.c.l.b16 %v1159
        %v1245 = vunpack.c.h.b16 %v1159
        %v1246 = vunpack.c.l.b16 %v1160
        %v1247 = vunpack.c.h.b16 %v1160
        %v1248 = vunpack.c.l.b16 %v1161
        %v1249 = vunpack.c.h.b16 %v1161
        %v1250 = vunpack.c.l.b16 %v1162
        %v1251 = vunpack.c.h.b16 %v1162
        %v1252 = vunpack.c.l.b16 %v1163
        %v1253 = vunpack.c.h.b16 %v1163
        %v1254 = vunpack.c.l.b16 %v1164
        %v1255 = vunpack.c.h.b16 %v1164
        %v1256 = vunpack.c.l.b16 %v1165
        %v1257 = vunpack.c.h.b16 %v1165
        %v1258 = vunpack.c.l.b16 %v1166
        %v1259 = vunpack.c.h.b16 %v1166
        %v1260 = vunpack.c.l.b16 %v1167
        %v1261 = vunpack.c.h.b16 %v1167
        %v1262 = vunpack.c.l.b16 %v1168
        %v1263 = vunpack.c.h.b16 %v1168
        %v1264 = vunpack.c.l.b16 %v1169
        %v1265 = vunpack.c.h.b16 %v1169
        %v1266 = vunpack.c.l.b16 %v1170
        %v1267 = vunpack.c.h.b16 %v1170
        %v1268 = vunpack.c.l.b16 %v1171
        %v1269 = vunpack.c.h.b16 %v1171
        %v1270 = vunpack.c.l.b16 %v1172
        %v1271 = vunpack.c.h.b16 %v1172
        %v1272 = vunpack.c.l.b16 %v1173
        %v1273 = vunpack.c.h.b16 %v1173
        %v1274 = vunpack.c.l.b16 %v1174
        %v1275 = vunpack.c.h.b16 %v1174
        %v1276 = vunpack.c.l.b16 %v1175
        %v1277 = vunpack.c.h.b16 %v1175
        %v1278 = vunpack.c.l.b16 %v1176
        %v1279 = vunpack.c.h.b16 %v1176
        %v1280 = vunpack.c.l.b16 %v1177
        %v1281 = vunpack.c.h.b16 %v1177
        %v1282 = vunpack.c.l.b16 %v1178
        %v1283 = vunpack.c.h.b16 %v1178
        %v1284 = vpack.c.b16 %v1234, %v1232
        %v1285 = vpack.c.b16 %v1235, %v1233
        %v1286 = vpack.c.b16 %v1238, %v1236
        %v1287 = vpack.c.b16 %v1239, %v1237
        %v1288 = vpack.c.b16 %v1242, %v1240
        %v1289 = vpack.c.b16 %v1243, %v1241
        %v1290 = vpack.c.b16 %v1246, %v1244
        %v1291 = vpack.c.b16 %v1247, %v1245
        %v1292 = vpack.c.b16 %v1250, %v1248
        %v1293 = vpack.c.b16 %v1251, %v1249
        %v1294 = vpack.c.b16 %v1254, %v1252
        %v1295 = vpack.c.b16 %v1255, %v1253
        %v1296 = vpack.c.b16 %v1258, %v1256
        %v1297 = vpack.c.b16 %v1259, %v1257
        %v1298 = vpack.c.b16 %v1262, %v1260
        %v1299 = vpack.c.b16 %v1263, %v1261
        %v1300 = vpack.c.b16 %v1266, %v1264
        %v1301 = vpack.c.b16 %v1267, %v1265
        %v1302 = vpack.c.b16 %v1270, %v1268
        %v1303 = vpack.c.b16 %v1271, %v1269
        %v1304 = vpack.c.b16 %v1274, %v1272
        %v1305 = vpack.c.b16 %v1275, %v1273
        %v1306 = vpack.c.b16 %v1278, %v1276
        %v1307 = vpack.c.b16 %v1279, %v1277
        %v1308 = vpack.c.b16 %v1282, %v1280
        %v1309 = vpack.c.b16 %v1283, %v1281
        %vm1336 = vcmask 654336
        %v1338 = vsel %vm1336, %v1121, 0
        %v1341 = vsel %vm1336, %v1123, 0
        %v1344 = vsel %vm1336, %v1125, 0
        %1346 = vmatprep.subr.bf16.mxu0 %v1285
        %1347 = vmatpush1.bf16.msra.mxu0 %v1284
        %1348 = vmatprep.subr.bf16.mxu0 %v1287
        %1349 = vmatpush1.bf16.msra.mxu0 %v1286
        %1350 = vmatprep.subr.bf16.mxu0 %v1289
        %1351 = vmatpush1.bf16.msra.mxu0 %v1288
        %1352 = vmatprep.subr.bf16.mxu0 %v1291
        %1353 = vmatpush1.bf16.msra.mxu0 %v1290
        %1354 = vmatprep.subr.bf16.mxu0 %v1293
        %1355 = vmatpush1.bf16.msra.mxu0 %v1292
        %1356 = vmatprep.subr.bf16.mxu0 %v1295
        %1357 = vmatpush1.bf16.msra.mxu0 %v1294
        %1358 = vmatprep.subr.bf16.mxu0 %v1297
        %1359 = vmatpush1.bf16.msra.mxu0 %v1296
        %1360 = vmatprep.subr.bf16.mxu0 %v1299
        %1361 = vmatpush1.bf16.msra.mxu0 %v1298
        %1362 = vmatprep.subr.bf16.mxu0 %v1301
        %1363 = vmatpush1.bf16.msra.mxu0 %v1300
        %1364 = vmatprep.subr.bf16.mxu0 %v1303
        %1365 = vmatpush1.bf16.msra.mxu0 %v1302
        %1366 = vmatprep.subr.bf16.mxu0 %v1305
        %1367 = vmatpush1.bf16.msra.mxu0 %v1304
        %1368 = vmatprep.subr.bf16.mxu0 %v1307
        %1369 = vmatpush1.bf16.msra.mxu0 %v1306
        %1370 = vmatprep.subr.bf16.mxu0 %v1309
        %1371 = vmatpush1.bf16.msra.mxu0 %v1308
        %1372 = vmatprep.subr.bf16.mxu0 0
        %1373 = vmatpush1.bf16.msra.mxu0 0
        %1374 = vmatprep.subr.bf16.mxu0 0
        %1375 = vmatpush1.bf16.msra.mxu0 0
        %1376 = vmatprep.subr.bf16.mxu0 0
        %1377 = vmatpush1.bf16.msra.mxu0 0
        %1378 = vmatprep.mubr.bf16.mxu0 %v1338
        %1379 = vmatmul.mubr.bf16.gmra.mrb[0].mxu0 %v1120
        %v1380 = vpop.f32.mrb[0].mxu0
        %v1381 = vadd.f32 0.0, %v1380
        %v1382 = vpop.f32.mrb[0].mxu0
        %v1383 = vadd.f32 0.0, %v1382
        %v1384 = vpop.f32.mrb[0].mxu0
        %v1385 = vadd.f32 0.0, %v1384
        %v1386 = vpop.f32.mrb[0].mxu0
        %v1387 = vadd.f32 0.0, %v1386
        %1388 = vmatprep.mubr.bf16.mxu0 %v1341
        %1389 = vmatmul.mubr.bf16.gmra.mrb[0].mxu0 %v1122
        %v1390 = vpop.f32.mrb[0].mxu0
        %v1391 = vadd.f32 0.0, %v1390
        %v1392 = vpop.f32.mrb[0].mxu0
        %v1393 = vadd.f32 0.0, %v1392
        %v1394 = vpop.f32.mrb[0].mxu0
        %v1395 = vadd.f32 0.0, %v1394
        %v1396 = vpop.f32.mrb[0].mxu0
        %v1397 = vadd.f32 0.0, %v1396
        %1398 = vmatprep.mubr.bf16.mxu0 %v1344
        %1399 = vmatmul.mubr.bf16.gmra.mrb[0].mxu0 %v1124
        %v1400 = vpop.f32.mrb[0].mxu0
        %v1401 = vadd.f32 0.0, %v1400
        %v1402 = vpop.f32.mrb[0].mxu0
        %v1403 = vadd.f32 0.0, %v1402
        %v1404 = vpop.f32.mrb[0].mxu0
        %v1405 = vpop.f32.mrb[0].mxu0
        %1406 = vdwg.mxu0
        %v1433 = vunpack.c.l.b16 %v1126
        %v1434 = vunpack.c.h.b16 %v1126
        %v1435 = vunpack.c.l.b16 %v1127
        %v1436 = vunpack.c.h.b16 %v1127
        %v1437 = vunpack.c.l.b16 %v1128
        %v1438 = vunpack.c.h.b16 %v1128
        %v1439 = vunpack.c.l.b16 %v1129
        %v1440 = vunpack.c.h.b16 %v1129
        %v1441 = vunpack.c.l.b16 %v1130
        %v1442 = vunpack.c.h.b16 %v1130
        %v1443 = vunpack.c.l.b16 %v1131
        %v1444 = vunpack.c.h.b16 %v1131
        %v1445 = vunpack.c.l.b16 %v1132
        %v1446 = vunpack.c.h.b16 %v1132
        %v1447 = vunpack.c.l.b16 %v1133
        %v1448 = vunpack.c.h.b16 %v1133
        %v1449 = vunpack.c.l.b16 %v1134
        %v1450 = vunpack.c.h.b16 %v1134
        %v1451 = vunpack.c.l.b16 %v1135
        %v1452 = vunpack.c.h.b16 %v1135
        %v1453 = vunpack.c.l.b16 %v1136
        %v1454 = vunpack.c.h.b16 %v1136
        %v1455 = vunpack.c.l.b16 %v1137
        %v1456 = vunpack.c.h.b16 %v1137
        %v1457 = vunpack.c.l.b16 %v1138
        %v1458 = vunpack.c.h.b16 %v1138
        %v1459 = vunpack.c.l.b16 %v1139
        %v1460 = vunpack.c.h.b16 %v1139
        %v1461 = vunpack.c.l.b16 %v1140
        %v1462 = vunpack.c.h.b16 %v1140
        %v1463 = vunpack.c.l.b16 %v1141
        %v1464 = vunpack.c.h.b16 %v1141
        %v1465 = vunpack.c.l.b16 %v1142
        %v1466 = vunpack.c.h.b16 %v1142
        %v1467 = vunpack.c.l.b16 %v1143
        %v1468 = vunpack.c.h.b16 %v1143
        %v1469 = vunpack.c.l.b16 %v1144
        %v1470 = vunpack.c.h.b16 %v1144
        %v1471 = vunpack.c.l.b16 %v1145
        %v1472 = vunpack.c.h.b16 %v1145
        %v1473 = vunpack.c.l.b16 %v1146
        %v1474 = vunpack.c.h.b16 %v1146
        %v1475 = vunpack.c.l.b16 %v1147
        %v1476 = vunpack.c.h.b16 %v1147
        %v1477 = vunpack.c.l.b16 %v1148
        %v1478 = vunpack.c.h.b16 %v1148
        %v1479 = vunpack.c.l.b16 %v1149
        %v1480 = vunpack.c.h.b16 %v1149
        %v1481 = vunpack.c.l.b16 %v1150
        %v1482 = vunpack.c.h.b16 %v1150
        %v1483 = vunpack.c.l.b16 %v1151
        %v1484 = vunpack.c.h.b16 %v1151
        %v1485 = vpack.c.b16 %v1435, %v1433
        %v1486 = vpack.c.b16 %v1436, %v1434
        %v1487 = vpack.c.b16 %v1439, %v1437
        %v1488 = vpack.c.b16 %v1440, %v1438
        %v1489 = vpack.c.b16 %v1443, %v1441
        %v1490 = vpack.c.b16 %v1444, %v1442
        %v1491 = vpack.c.b16 %v1447, %v1445
        %v1492 = vpack.c.b16 %v1448, %v1446
        %v1493 = vpack.c.b16 %v1451, %v1449
        %v1494 = vpack.c.b16 %v1452, %v1450
        %v1495 = vpack.c.b16 %v1455, %v1453
        %v1496 = vpack.c.b16 %v1456, %v1454
        %v1497 = vpack.c.b16 %v1459, %v1457
        %v1498 = vpack.c.b16 %v1460, %v1458
        %v1499 = vpack.c.b16 %v1463, %v1461
        %v1500 = vpack.c.b16 %v1464, %v1462
        %v1501 = vpack.c.b16 %v1467, %v1465
        %v1502 = vpack.c.b16 %v1468, %v1466
        %v1503 = vpack.c.b16 %v1471, %v1469
        %v1504 = vpack.c.b16 %v1472, %v1470
        %v1505 = vpack.c.b16 %v1475, %v1473
        %v1506 = vpack.c.b16 %v1476, %v1474
        %v1507 = vpack.c.b16 %v1479, %v1477
        %v1508 = vpack.c.b16 %v1480, %v1478
        %v1509 = vpack.c.b16 %v1483, %v1481
        %v1510 = vpack.c.b16 %v1484, %v1482
        %v1538 = vsel %vm1336, %v1115, 0
        %v1541 = vsel %vm1336, %v1117, 0
        %v1544 = vsel %vm1336, %v1119, 0
        %1546 = vmatprep.subr.bf16.mxu0 %v1486
        %1547 = vmatpush1.bf16.msra.mxu0 %v1485
        %1548 = vmatprep.subr.bf16.mxu0 %v1488
        %1549 = vmatpush1.bf16.msra.mxu0 %v1487
        %1550 = vmatprep.subr.bf16.mxu0 %v1490
        %1551 = vmatpush1.bf16.msra.mxu0 %v1489
        %1552 = vmatprep.subr.bf16.mxu0 %v1492
        %1553 = vmatpush1.bf16.msra.mxu0 %v1491
        %1554 = vmatprep.subr.bf16.mxu0 %v1494
        %1555 = vmatpush1.bf16.msra.mxu0 %v1493
        %1556 = vmatprep.subr.bf16.mxu0 %v1496
        %1557 = vmatpush1.bf16.msra.mxu0 %v1495
        %1558 = vmatprep.subr.bf16.mxu0 %v1498
        %1559 = vmatpush1.bf16.msra.mxu0 %v1497
        %1560 = vmatprep.subr.bf16.mxu0 %v1500
        %1561 = vmatpush1.bf16.msra.mxu0 %v1499
        %1562 = vmatprep.subr.bf16.mxu0 %v1502
        %1563 = vmatpush1.bf16.msra.mxu0 %v1501
        %1564 = vmatprep.subr.bf16.mxu0 %v1504
        %1565 = vmatpush1.bf16.msra.mxu0 %v1503
        %1566 = vmatprep.subr.bf16.mxu0 %v1506
        %1567 = vmatpush1.bf16.msra.mxu0 %v1505
        %1568 = vmatprep.subr.bf16.mxu0 %v1508
        %1569 = vmatpush1.bf16.msra.mxu0 %v1507
        %1570 = vmatprep.subr.bf16.mxu0 %v1510
        %1571 = vmatpush1.bf16.msra.mxu0 %v1509
        %1572 = vmatprep.subr.bf16.mxu0 0
        %1573 = vmatpush1.bf16.msra.mxu0 0
        %1574 = vmatprep.subr.bf16.mxu0 0
        %1575 = vmatpush1.bf16.msra.mxu0 0
        %1576 = vmatprep.subr.bf16.mxu0 0
        %1577 = vmatpush1.bf16.msra.mxu0 0
        %1578 = vmatprep.mubr.bf16.mxu0 %v1538
        %1579 = vmatmul.mubr.bf16.gmra.mrb[0].mxu0 %v1114
        %v1580 = vpop.f32.mrb[0].mxu0
        %v1581 = vadd.f32 %v1381, %v1580
        %v1582 = vpop.f32.mrb[0].mxu0
        %v1583 = vadd.f32 %v1383, %v1582
        %v1584 = vpop.f32.mrb[0].mxu0
        %v1585 = vadd.f32 %v1385, %v1584
        %v1586 = vpop.f32.mrb[0].mxu0
        %v1587 = vadd.f32 %v1387, %v1586
        %1588 = vmatprep.mubr.bf16.mxu0 %v1541
        %1589 = vmatmul.mubr.bf16.gmra.mrb[0].mxu0 %v1116
        %v1590 = vpop.f32.mrb[0].mxu0
        %v1591 = vadd.f32 %v1391, %v1590
        %v1592 = vpop.f32.mrb[0].mxu0
        %v1593 = vadd.f32 %v1393, %v1592
        %v1594 = vpop.f32.mrb[0].mxu0
        %v1595 = vadd.f32 %v1395, %v1594
        %v1596 = vpop.f32.mrb[0].mxu0
        %v1597 = vadd.f32 %v1397, %v1596
        %1598 = vmatprep.mubr.bf16.mxu0 %v1544
        %1599 = vmatmul.mubr.bf16.gmra.mrb[0].mxu0 %v1118
        %v1600 = vpop.f32.mrb[0].mxu0
        %v1601 = vadd.f32 %v1401, %v1600
        %v1602 = vpop.f32.mrb[0].mxu0
        %v1603 = vadd.f32 %v1403, %v1602
        %v1604 = vpop.f32.mrb[0].mxu0
        %v1605 = vpop.f32.mrb[0].mxu0
        %1606 = vdwg.mxu0
        %vm1613 = vcmask 1043456
        %v1614 = vrot.slane %v1114, 4
        %v1615 = vrot.slane %v1116, 4
        %v1616 = vsel %vm1613, %v1614, %v1615
        %v1617 = vrot.slane %v1115, 4
        %v1618 = vrot.slane %v1117, 4
        %v1619 = vsel %vm1613, %v1617, %v1618
        %v1620 = vrot.slane %v1118, 4
        %v1621 = vsel %vm1613, %v1615, %v1620
        %v1622 = vrot.slane %v1119, 4
        %v1623 = vsel %vm1613, %v1618, %v1622
        %v1653 = vunpack.c.l.b16 %v1180
        %v1654 = vunpack.c.h.b16 %v1180
        %v1655 = vunpack.c.l.b16 %v1181
        %v1656 = vunpack.c.h.b16 %v1181
        %v1657 = vunpack.c.l.b16 %v1182
        %v1658 = vunpack.c.h.b16 %v1182
        %v1659 = vunpack.c.l.b16 %v1183
        %v1660 = vunpack.c.h.b16 %v1183
        %v1661 = vunpack.c.l.b16 %v1184
        %v1662 = vunpack.c.h.b16 %v1184
        %v1663 = vunpack.c.l.b16 %v1185
        %v1664 = vunpack.c.h.b16 %v1185
        %v1665 = vunpack.c.l.b16 %v1186
        %v1666 = vunpack.c.h.b16 %v1186
        %v1667 = vunpack.c.l.b16 %v1187
        %v1668 = vunpack.c.h.b16 %v1187
        %v1669 = vunpack.c.l.b16 %v1188
        %v1670 = vunpack.c.h.b16 %v1188
        %v1671 = vunpack.c.l.b16 %v1189
        %v1672 = vunpack.c.h.b16 %v1189
        %v1673 = vunpack.c.l.b16 %v1190
        %v1674 = vunpack.c.h.b16 %v1190
        %v1675 = vunpack.c.l.b16 %v1191
        %v1676 = vunpack.c.h.b16 %v1191
        %v1677 = vunpack.c.l.b16 %v1192
        %v1678 = vunpack.c.h.b16 %v1192
        %v1679 = vunpack.c.l.b16 %v1193
        %v1680 = vunpack.c.h.b16 %v1193
        %v1681 = vunpack.c.l.b16 %v1194
        %v1682 = vunpack.c.h.b16 %v1194
        %v1683 = vunpack.c.l.b16 %v1195
        %v1684 = vunpack.c.h.b16 %v1195
        %v1685 = vunpack.c.l.b16 %v1196
        %v1686 = vunpack.c.h.b16 %v1196
        %v1687 = vunpack.c.l.b16 %v1197
        %v1688 = vunpack.c.h.b16 %v1197
        %v1689 = vunpack.c.l.b16 %v1198
        %v1690 = vunpack.c.h.b16 %v1198
        %v1691 = vunpack.c.l.b16 %v1199
        %v1692 = vunpack.c.h.b16 %v1199
        %v1693 = vunpack.c.l.b16 %v1200
        %v1694 = vunpack.c.h.b16 %v1200
        %v1695 = vunpack.c.l.b16 %v1201
        %v1696 = vunpack.c.h.b16 %v1201
        %v1697 = vunpack.c.l.b16 %v1202
        %v1698 = vunpack.c.h.b16 %v1202
        %v1699 = vunpack.c.l.b16 %v1203
        %v1700 = vunpack.c.h.b16 %v1203
        %v1701 = vunpack.c.l.b16 %v1204
        %v1702 = vunpack.c.h.b16 %v1204
        %v1703 = vunpack.c.l.b16 %v1205
        %v1704 = vunpack.c.h.b16 %v1205
        %v1705 = vpack.c.b16 %v1655, %v1653
        %v1706 = vpack.c.b16 %v1656, %v1654
        %v1707 = vpack.c.b16 %v1659, %v1657
        %v1708 = vpack.c.b16 %v1660, %v1658
        %v1709 = vpack.c.b16 %v1663, %v1661
        %v1710 = vpack.c.b16 %v1664, %v1662
        %v1711 = vpack.c.b16 %v1667, %v1665
        %v1712 = vpack.c.b16 %v1668, %v1666
        %v1713 = vpack.c.b16 %v1671, %v1669
        %v1714 = vpack.c.b16 %v1672, %v1670
        %v1715 = vpack.c.b16 %v1675, %v1673
        %v1716 = vpack.c.b16 %v1676, %v1674
        %v1717 = vpack.c.b16 %v1679, %v1677
        %v1718 = vpack.c.b16 %v1680, %v1678
        %v1719 = vpack.c.b16 %v1683, %v1681
        %v1720 = vpack.c.b16 %v1684, %v1682
        %v1721 = vpack.c.b16 %v1687, %v1685
        %v1722 = vpack.c.b16 %v1688, %v1686
        %v1723 = vpack.c.b16 %v1691, %v1689
        %v1724 = vpack.c.b16 %v1692, %v1690
        %v1725 = vpack.c.b16 %v1695, %v1693
        %v1726 = vpack.c.b16 %v1696, %v1694
        %v1727 = vpack.c.b16 %v1699, %v1697
        %v1728 = vpack.c.b16 %v1700, %v1698
        %v1729 = vpack.c.b16 %v1703, %v1701
        %v1730 = vpack.c.b16 %v1704, %v1702
        %v1758 = vsel %vm1336, %v1619, 0
        %v1761 = vsel %vm1336, %v1623, 0
        %v1764 = vsel %vm1336, %v1622, 0
        %1766 = vmatprep.subr.bf16.mxu0 %v1706
        %1767 = vmatpush1.bf16.msra.mxu0 %v1705
        %1768 = vmatprep.subr.bf16.mxu0 %v1708
        %1769 = vmatpush1.bf16.msra.mxu0 %v1707
        %1770 = vmatprep.subr.bf16.mxu0 %v1710
        %1771 = vmatpush1.bf16.msra.mxu0 %v1709
        %1772 = vmatprep.subr.bf16.mxu0 %v1712
        %1773 = vmatpush1.bf16.msra.mxu0 %v1711
        %1774 = vmatprep.subr.bf16.mxu0 %v1714
        %1775 = vmatpush1.bf16.msra.mxu0 %v1713
        %1776 = vmatprep.subr.bf16.mxu0 %v1716
        %1777 = vmatpush1.bf16.msra.mxu0 %v1715
        %1778 = vmatprep.subr.bf16.mxu0 %v1718
        %1779 = vmatpush1.bf16.msra.mxu0 %v1717
        %1780 = vmatprep.subr.bf16.mxu0 %v1720
        %1781 = vmatpush1.bf16.msra.mxu0 %v1719
        %1782 = vmatprep.subr.bf16.mxu0 %v1722
        %1783 = vmatpush1.bf16.msra.mxu0 %v1721
        %1784 = vmatprep.subr.bf16.mxu0 %v1724
        %1785 = vmatpush1.bf16.msra.mxu0 %v1723
        %1786 = vmatprep.subr.bf16.mxu0 %v1726
        %1787 = vmatpush1.bf16.msra.mxu0 %v1725
        %1788 = vmatprep.subr.bf16.mxu0 %v1728
        %1789 = vmatpush1.bf16.msra.mxu0 %v1727
        %1790 = vmatprep.subr.bf16.mxu0 %v1730
        %1791 = vmatpush1.bf16.msra.mxu0 %v1729
        %1792 = vmatprep.subr.bf16.mxu0 0
        %1793 = vmatpush1.bf16.msra.mxu0 0
        %1794 = vmatprep.subr.bf16.mxu0 0
        %1795 = vmatpush1.bf16.msra.mxu0 0
        %1796 = vmatprep.subr.bf16.mxu0 0
        %1797 = vmatpush1.bf16.msra.mxu0 0
        %1798 = vmatprep.mubr.bf16.mxu0 %v1758
        %1799 = vmatmul.mubr.bf16.gmra.mrb[0].mxu0 %v1616
        %v1800 = vpop.f32.mrb[0].mxu0
        %v1801 = vadd.f32 0.0, %v1800
        %v1802 = vpop.f32.mrb[0].mxu0
        %v1803 = vadd.f32 0.0, %v1802
        %v1804 = vpop.f32.mrb[0].mxu0
        %v1805 = vadd.f32 0.0, %v1804
        %v1806 = vpop.f32.mrb[0].mxu0
        %v1807 = vadd.f32 0.0, %v1806
        %1808 = vmatprep.mubr.bf16.mxu0 %v1761
        %1809 = vmatmul.mubr.bf16.gmra.mrb[0].mxu0 %v1621
        %v1810 = vpop.f32.mrb[0].mxu0
        %v1811 = vadd.f32 0.0, %v1810
        %v1812 = vpop.f32.mrb[0].mxu0
        %v1813 = vadd.f32 0.0, %v1812
        %v1814 = vpop.f32.mrb[0].mxu0
        %v1815 = vadd.f32 0.0, %v1814
        %v1816 = vpop.f32.mrb[0].mxu0
        %v1817 = vadd.f32 0.0, %v1816
        %1818 = vmatprep.mubr.bf16.mxu0 %v1764
        %1819 = vmatmul.mubr.bf16.gmra.mrb[0].mxu0 %v1620
        %v1820 = vpop.f32.mrb[0].mxu0
        %v1821 = vadd.f32 0.0, %v1820
        %v1822 = vpop.f32.mrb[0].mxu0
        %v1823 = vadd.f32 0.0, %v1822
        %v1824 = vpop.f32.mrb[0].mxu0
        %v1825 = vpop.f32.mrb[0].mxu0
        %1826 = vdwg.mxu0
        %v1827 = vadd.f32 %v1581, %v1801
        %v1828 = vadd.f32 %v1583, %v1803
        %v1829 = vadd.f32 %v1585, %v1805
        %v1830 = vadd.f32 %v1587, %v1807
        %v1831 = vadd.f32 %v1591, %v1811
        %v1832 = vadd.f32 %v1593, %v1813
        %v1833 = vadd.f32 %v1595, %v1815
        %v1834 = vadd.f32 %v1597, %v1817
        %v1835 = vadd.f32 %v1601, %v1821
        %v1836 = vadd.f32 %v1603, %v1823
        %1837 = vmatprep.subr.bf16.mxu0 %v1285
        %1838 = vmatpush1.bf16.msra.mxu0 %v1284
        %1839 = vmatprep.subr.bf16.mxu0 %v1287
        %1840 = vmatpush1.bf16.msra.mxu0 %v1286
        %1841 = vmatprep.subr.bf16.mxu0 %v1289
        %1842 = vmatpush1.bf16.msra.mxu0 %v1288
        %1843 = vmatprep.subr.bf16.mxu0 %v1291
        %1844 = vmatpush1.bf16.msra.mxu0 %v1290
        %1845 = vmatprep.subr.bf16.mxu0 %v1293
        %1846 = vmatpush1.bf16.msra.mxu0 %v1292
        %1847 = vmatprep.subr.bf16.mxu0 %v1295
        %1848 = vmatpush1.bf16.msra.mxu0 %v1294
        %1849 = vmatprep.subr.bf16.mxu0 %v1297
        %1850 = vmatpush1.bf16.msra.mxu0 %v1296
        %1851 = vmatprep.subr.bf16.mxu0 %v1299
        %1852 = vmatpush1.bf16.msra.mxu0 %v1298
        %1853 = vmatprep.subr.bf16.mxu0 %v1301
        %1854 = vmatpush1.bf16.msra.mxu0 %v1300
        %1855 = vmatprep.subr.bf16.mxu0 %v1303
        %1856 = vmatpush1.bf16.msra.mxu0 %v1302
        %1857 = vmatprep.subr.bf16.mxu0 %v1305
        %1858 = vmatpush1.bf16.msra.mxu0 %v1304
        %1859 = vmatprep.subr.bf16.mxu0 %v1307
        %1860 = vmatpush1.bf16.msra.mxu0 %v1306
        %1861 = vmatprep.subr.bf16.mxu0 %v1309
        %1862 = vmatpush1.bf16.msra.mxu0 %v1308
        %1863 = vmatprep.subr.bf16.mxu0 0
        %1864 = vmatpush1.bf16.msra.mxu0 0
        %1865 = vmatprep.subr.bf16.mxu0 0
        %1866 = vmatpush1.bf16.msra.mxu0 0
        %1867 = vmatprep.subr.bf16.mxu0 0
        %1868 = vmatpush1.bf16.msra.mxu0 0
        %1869 = vmatprep.mubr.bf16.mxu0 %v1758
        %1870 = vmatmul.mubr.bf16.gmra.mrb[0].mxu0 %v1616
        %v1871 = vpop.f32.mrb[0].mxu0
        %v1872 = vadd.f32 0.0, %v1871
        %v1873 = vpop.f32.mrb[0].mxu0
        %v1874 = vadd.f32 0.0, %v1873
        %v1875 = vpop.f32.mrb[0].mxu0
        %v1876 = vadd.f32 0.0, %v1875
        %v1877 = vpop.f32.mrb[0].mxu0
        %v1878 = vadd.f32 0.0, %v1877
        %1879 = vmatprep.mubr.bf16.mxu0 %v1761
        %1880 = vmatmul.mubr.bf16.gmra.mrb[0].mxu0 %v1621
        %v1881 = vpop.f32.mrb[0].mxu0
        %v1882 = vadd.f32 0.0, %v1881
        %v1883 = vpop.f32.mrb[0].mxu0
        %v1884 = vadd.f32 0.0, %v1883
        %v1885 = vpop.f32.mrb[0].mxu0
        %v1886 = vadd.f32 0.0, %v1885
        %v1887 = vpop.f32.mrb[0].mxu0
        %v1888 = vadd.f32 0.0, %v1887
        %1889 = vmatprep.mubr.bf16.mxu0 %v1764
        %1890 = vmatmul.mubr.bf16.gmra.mrb[0].mxu0 %v1620
        %v1891 = vpop.f32.mrb[0].mxu0
        %v1892 = vadd.f32 0.0, %v1891
        %v1893 = vpop.f32.mrb[0].mxu0
        %v1894 = vadd.f32 0.0, %v1893
        %v1895 = vpop.f32.mrb[0].mxu0
        %v1896 = vpop.f32.mrb[0].mxu0
        %1897 = vdwg.mxu0
        %1898 = vmatprep.subr.bf16.mxu0 %v1486
        %1899 = vmatpush1.bf16.msra.mxu0 %v1485
        %1900 = vmatprep.subr.bf16.mxu0 %v1488
        %1901 = vmatpush1.bf16.msra.mxu0 %v1487
        %1902 = vmatprep.subr.bf16.mxu0 %v1490
        %1903 = vmatpush1.bf16.msra.mxu0 %v1489
        %1904 = vmatprep.subr.bf16.mxu0 %v1492
        %1905 = vmatpush1.bf16.msra.mxu0 %v1491
        %1906 = vmatprep.subr.bf16.mxu0 %v1494
        %1907 = vmatpush1.bf16.msra.mxu0 %v1493
        %1908 = vmatprep.subr.bf16.mxu0 %v1496
        %1909 = vmatpush1.bf16.msra.mxu0 %v1495
        %1910 = vmatprep.subr.bf16.mxu0 %v1498
        %1911 = vmatpush1.bf16.msra.mxu0 %v1497
        %1912 = vmatprep.subr.bf16.mxu0 %v1500
        %1913 = vmatpush1.bf16.msra.mxu0 %v1499
        %1914 = vmatprep.subr.bf16.mxu0 %v1502
        %1915 = vmatpush1.bf16.msra.mxu0 %v1501
        %1916 = vmatprep.subr.bf16.mxu0 %v1504
        %1917 = vmatpush1.bf16.msra.mxu0 %v1503
        %1918 = vmatprep.subr.bf16.mxu0 %v1506
        %1919 = vmatpush1.bf16.msra.mxu0 %v1505
        %1920 = vmatprep.subr.bf16.mxu0 %v1508
        %1921 = vmatpush1.bf16.msra.mxu0 %v1507
        %1922 = vmatprep.subr.bf16.mxu0 %v1510
        %1923 = vmatpush1.bf16.msra.mxu0 %v1509
        %1924 = vmatprep.subr.bf16.mxu0 0
        %1925 = vmatpush1.bf16.msra.mxu0 0
        %1926 = vmatprep.subr.bf16.mxu0 0
        %1927 = vmatpush1.bf16.msra.mxu0 0
        %1928 = vmatprep.subr.bf16.mxu0 0
        %1929 = vmatpush1.bf16.msra.mxu0 0
        %1930 = vmatprep.mubr.bf16.mxu0 %v1338
        %1931 = vmatmul.mubr.bf16.gmra.mrb[0].mxu0 %v1120
        %v1932 = vpop.f32.mrb[0].mxu0
        %v1933 = vadd.f32 %v1872, %v1932
        %v1934 = vpop.f32.mrb[0].mxu0
        %v1935 = vadd.f32 %v1874, %v1934
        %v1936 = vpop.f32.mrb[0].mxu0
        %v1937 = vadd.f32 %v1876, %v1936
        %v1938 = vpop.f32.mrb[0].mxu0
        %v1939 = vadd.f32 %v1878, %v1938
        %1940 = vmatprep.mubr.bf16.mxu0 %v1341
        %1941 = vmatmul.mubr.bf16.gmra.mrb[0].mxu0 %v1122
        %v1942 = vpop.f32.mrb[0].mxu0
        %v1943 = vadd.f32 %v1882, %v1942
        %v1944 = vpop.f32.mrb[0].mxu0
        %v1945 = vadd.f32 %v1884, %v1944
        %v1946 = vpop.f32.mrb[0].mxu0
        %v1947 = vadd.f32 %v1886, %v1946
        %v1948 = vpop.f32.mrb[0].mxu0
        %v1949 = vadd.f32 %v1888, %v1948
        %1950 = vmatprep.mubr.bf16.mxu0 %v1344
        %1951 = vmatmul.mubr.bf16.gmra.mrb[0].mxu0 %v1124
        %v1952 = vpop.f32.mrb[0].mxu0
        %v1953 = vadd.f32 %v1892, %v1952
        %v1954 = vpop.f32.mrb[0].mxu0
        %v1955 = vadd.f32 %v1894, %v1954
        %v1956 = vpop.f32.mrb[0].mxu0
        %v1957 = vpop.f32.mrb[0].mxu0
        %1958 = vdwg.mxu0
        %v1965 = vrot.slane %v1120, 4
        %v1966 = vrot.slane %v1122, 4
        %v1967 = vsel %vm1613, %v1965, %v1966
        %v1968 = vrot.slane %v1121, 4
        %v1969 = vrot.slane %v1123, 4
        %v1970 = vsel %vm1613, %v1968, %v1969
        %v1971 = vrot.slane %v1124, 4
        %v1972 = vsel %vm1613, %v1966, %v1971
        %v1973 = vrot.slane %v1125, 4
        %v1974 = vsel %vm1613, %v1969, %v1973
        %v1979 = vsel %vm1336, %v1970, 0
        %v1982 = vsel %vm1336, %v1974, 0
        %v1985 = vsel %vm1336, %v1973, 0
        %1987 = vmatprep.subr.bf16.mxu0 %v1706
        %1988 = vmatpush1.bf16.msra.mxu0 %v1705
        %1989 = vmatprep.subr.bf16.mxu0 %v1708
        %1990 = vmatpush1.bf16.msra.mxu0 %v1707
        %1991 = vmatprep.subr.bf16.mxu0 %v1710
        %1992 = vmatpush1.bf16.msra.mxu0 %v1709
        %1993 = vmatprep.subr.bf16.mxu0 %v1712
        %1994 = vmatpush1.bf16.msra.mxu0 %v1711
        %1995 = vmatprep.subr.bf16.mxu0 %v1714
        %1996 = vmatpush1.bf16.msra.mxu0 %v1713
        %1997 = vmatprep.subr.bf16.mxu0 %v1716
        %1998 = vmatpush1.bf16.msra.mxu0 %v1715
        %1999 = vmatprep.subr.bf16.mxu0 %v1718
        %2000 = vmatpush1.bf16.msra.mxu0 %v1717
        %2001 = vmatprep.subr.bf16.mxu0 %v1720
        %2002 = vmatpush1.bf16.msra.mxu0 %v1719
        %2003 = vmatprep.subr.bf16.mxu0 %v1722
        %2004 = vmatpush1.bf16.msra.mxu0 %v1721
        %2005 = vmatprep.subr.bf16.mxu0 %v1724
        %2006 = vmatpush1.bf16.msra.mxu0 %v1723
        %2007 = vmatprep.subr.bf16.mxu0 %v1726
        %2008 = vmatpush1.bf16.msra.mxu0 %v1725
        %2009 = vmatprep.subr.bf16.mxu0 %v1728
        %2010 = vmatpush1.bf16.msra.mxu0 %v1727
        %2011 = vmatprep.subr.bf16.mxu0 %v1730
        %2012 = vmatpush1.bf16.msra.mxu0 %v1729
        %2013 = vmatprep.subr.bf16.mxu0 0
        %2014 = vmatpush1.bf16.msra.mxu0 0
        %2015 = vmatprep.subr.bf16.mxu0 0
        %2016 = vmatpush1.bf16.msra.mxu0 0
        %2017 = vmatprep.subr.bf16.mxu0 0
        %2018 = vmatpush1.bf16.msra.mxu0 0
        %2019 = vmatprep.mubr.bf16.mxu0 %v1979
        %2020 = vmatmul.mubr.bf16.gmra.mrb[0].mxu0 %v1967
        %v2021 = vpop.f32.mrb[0].mxu0
        %v2022 = vadd.f32 0.0, %v2021
        %v2023 = vpop.f32.mrb[0].mxu0
        %v2024 = vadd.f32 0.0, %v2023
        %v2025 = vpop.f32.mrb[0].mxu0
        %v2026 = vadd.f32 0.0, %v2025
        %v2027 = vpop.f32.mrb[0].mxu0
        %v2028 = vadd.f32 0.0, %v2027
        %2029 = vmatprep.mubr.bf16.mxu0 %v1982
        %2030 = vmatmul.mubr.bf16.gmra.mrb[0].mxu0 %v1972
        %v2031 = vpop.f32.mrb[0].mxu0
        %v2032 = vadd.f32 0.0, %v2031
        %v2033 = vpop.f32.mrb[0].mxu0
        %v2034 = vadd.f32 0.0, %v2033
        %v2035 = vpop.f32.mrb[0].mxu0
        %v2036 = vadd.f32 0.0, %v2035
        %v2037 = vpop.f32.mrb[0].mxu0
        %v2038 = vadd.f32 0.0, %v2037
        %2039 = vmatprep.mubr.bf16.mxu0 %v1985
        %2040 = vmatmul.mubr.bf16.gmra.mrb[0].mxu0 %v1971
        %v2041 = vpop.f32.mrb[0].mxu0
        %v2042 = vadd.f32 0.0, %v2041
        %v2043 = vpop.f32.mrb[0].mxu0
        %v2044 = vadd.f32 0.0, %v2043
        %v2045 = vpop.f32.mrb[0].mxu0
        %v2046 = vpop.f32.mrb[0].mxu0
        %2047 = vdwg.mxu0
        %v2048 = vadd.f32 %v1933, %v2022
        %v2049 = vadd.f32 %v1935, %v2024
        %v2050 = vadd.f32 %v1937, %v2026
        %v2051 = vadd.f32 %v1939, %v2028
        %v2052 = vadd.f32 %v1943, %v2032
        %v2053 = vadd.f32 %v1945, %v2034
        %v2054 = vadd.f32 %v1947, %v2036
        %v2055 = vadd.f32 %v1949, %v2038
        %v2056 = vadd.f32 %v1953, %v2042
        %v2057 = vadd.f32 %v1955, %v2044
        %v2058 = vmax.f32 %v1827, %v2048
        %v2059 = vmax.f32 %v1828, %v2049
        %v2060 = vmax.f32 %v1829, %v2050
        %v2061 = vmax.f32 %v1830, %v2051
        %v2062 = vmax.f32 %v1831, %v2052
        %v2063 = vmax.f32 %v1832, %v2053
        %v2064 = vmax.f32 %v1833, %v2054
        %v2065 = vmax.f32 %v1834, %v2055
        %v2066 = vmax.f32 %v1835, %v2056
        %v2067 = vmax.f32 %v1836, %v2057
        %v2068 = vmax.f32 %v2058, %v2059
        %v2069 = vmax.f32 %v2060, %v2061
        %v2070 = vmax.f32 %v2062, %v2063
        %v2071 = vmax.f32 %v2064, %v2065
        %v2072 = vmax.f32 %v2066, %v2067
        %v2073 = vld [vmem:[%s4] sm:$0x1]
        %v2075 = vlaneseq
        %v2076 = vshrl.u32 %v2075, 7
        %v2077 = vsub.s32 0, %v2076
        %v2078 = vrot.slane %v2073, %v2077
        %v2080 = vadd.f32 %v2068, %v2078
        %v2081 = vadd.f32 %v2069, %v2078
        %v2082 = vadd.f32 %v2070, %v2078
        %v2083 = vadd.f32 %v2071, %v2078
        %v2084 = vadd.f32 %v2072, %v2078
        %v2085 = vmax.f32 %v2080, 0.0
        %v2086 = vmax.f32 %v2081, 0.0
        %v2087 = vmax.f32 %v2082, 0.0
        %v2088 = vmax.f32 %v2083, 0.0
        %v2089 = vmax.f32 %v2084, 0.0
        %v2090 = vpack.c.bf16 %v2086, %v2085
        %v2091 = vpack.c.bf16 %v2088, %v2087
        %v2092 = vpack.c.bf16 %v2089, %v2089
        %v2093 = vld [vmem:[%s5] sm:$0xf]
        %v2094 = vld [vmem:[%s5 + $0x4] sm:$0xf]
        %v2095 = vld [vmem:[%s5 + $0x8] sm:$0xf]
        %v2096 = vld [vmem:[%s5 + $0xc] sm:$0xf]
        %v2097 = vld [vmem:[%s5 + $0x10] sm:$0xf]
        %v2098 = vld [vmem:[%s5 + $0x14] sm:$0xf]
        %v2099 = vld [vmem:[%s5 + $0x18] sm:$0xf]
        %v2100 = vld [vmem:[%s5 + $0x1c] sm:$0xf]
        %v2101 = vld [vmem:[%s5 + $0x20] sm:$0xf]
        %v2102 = vld [vmem:[%s5 + $0x24] sm:$0xf]
        %s2103 = scalar_lea.vmem %s5, 40
        %v2104 = vld [vmem:[%s2103] sm:$0xf]
        %v2105 = vld [vmem:[%s2103 + $0x4] sm:$0xf]
        %v2106 = vld [vmem:[%s2103 + $0x8] sm:$0xf]
        %v2107 = vld [vmem:[%s2103 + $0xc] sm:$0xf]
        %v2108 = vld [vmem:[%s2103 + $0x10] sm:$0xf]
        %v2109 = vld [vmem:[%s2103 + $0x14] sm:$0xf]
        %v2110 = vld [vmem:[%s2103 + $0x18] sm:$0xf]
        %v2111 = vld [vmem:[%s2103 + $0x1c] sm:$0xf]
        %v2112 = vld [vmem:[%s2103 + $0x20] sm:$0xf]
        %v2113 = vld [vmem:[%s2103 + $0x24] sm:$0xf]
        %v2115 = vrot.slane %v2090, 4
        %v2126 = vunpack.c.l.b16 %v2104
        %v2127 = vunpack.c.l.b16 %v2105
        %v2128 = vunpack.c.l.b16 %v2106
        %v2129 = vunpack.c.l.b16 %v2107
        %v2130 = vunpack.c.l.b16 %v2108
        %v2131 = vunpack.c.l.b16 %v2109
        %v2132 = vunpack.c.l.b16 %v2110
        %v2133 = vunpack.c.l.b16 %v2111
        %v2134 = vunpack.c.l.b16 %v2112
        %v2135 = vunpack.c.l.b16 %v2113
        %v2136 = vpack.c.b16 %v2127, %v2126
        %v2137 = vpack.c.b16 %v2129, %v2128
        %v2138 = vpack.c.b16 %v2131, %v2130
        %v2139 = vpack.c.b16 %v2133, %v2132
        %v2140 = vpack.c.b16 %v2135, %v2134
        %v2147 = vsel %vm1336, %v2115, 0
        %2149 = vmatprep.subr.bf16.mxu0 0
        %2150 = vmatpush1.bf16.msra.mxu0 %v2136
        %2151 = vmatprep.subr.bf16.mxu0 0
        %2152 = vmatpush1.bf16.msra.mxu0 %v2137
        %2153 = vmatprep.subr.bf16.mxu0 0
        %2154 = vmatpush1.bf16.msra.mxu0 %v2138
        %2155 = vmatprep.subr.bf16.mxu0 0
        %2156 = vmatpush1.bf16.msra.mxu0 %v2139
        %2157 = vmatprep.subr.bf16.mxu0 0
        %2158 = vmatpush1.bf16.msra.mxu0 %v2140
        %2159 = vmatprep.subr.bf16.mxu0 0
        %2160 = vmatpush1.bf16.msra.mxu0 0
        %2161 = vmatprep.subr.bf16.mxu0 0
        %2162 = vmatpush1.bf16.msra.mxu0 0
        %2163 = vmatprep.subr.bf16.mxu0 0
        %2164 = vmatpush1.bf16.msra.mxu0 0
        %2165 = vmatprep.subr.bf16.mxu0 0
        %2166 = vmatpush1.bf16.msra.mxu0 0
        %2167 = vmatprep.subr.bf16.mxu0 0
        %2168 = vmatpush1.bf16.msra.mxu0 0
        %2169 = vmatprep.subr.bf16.mxu0 0
        %2170 = vmatpush1.bf16.msra.mxu0 0
        %2171 = vmatprep.subr.bf16.mxu0 0
        %2172 = vmatpush1.bf16.msra.mxu0 0
        %2173 = vmatprep.subr.bf16.mxu0 0
        %2174 = vmatpush1.bf16.msra.mxu0 0
        %2175 = vmatprep.subr.bf16.mxu0 0
        %2176 = vmatpush1.bf16.msra.mxu0 0
        %2177 = vmatprep.subr.bf16.mxu0 0
        %2178 = vmatpush1.bf16.msra.mxu0 0
        %2179 = vmatprep.subr.bf16.mxu0 0
        %2180 = vmatpush1.bf16.msra.mxu0 0
        %2181 = vmatprep.mubr.bf16.mxu0 0
        %2182 = vmatmul.mubr.bf16.gmra.mrb[0].mxu0 %v2147
        %v2183 = vpop.f32.mrb[0].mxu0
        %v2184 = vadd.f32 0.0, %v2183
        %v2185 = vpop.f32.mrb[0].mxu0
        %v2186 = vpop.f32.mrb[0].mxu0
        %v2187 = vpop.f32.mrb[0].mxu0
        %2188 = vdwg.mxu0
        %v2199 = vunpack.c.l.b16 %v2093
        %v2200 = vunpack.c.l.b16 %v2094
        %v2201 = vunpack.c.l.b16 %v2095
        %v2202 = vunpack.c.l.b16 %v2096
        %v2203 = vunpack.c.l.b16 %v2097
        %v2204 = vunpack.c.l.b16 %v2098
        %v2205 = vunpack.c.l.b16 %v2099
        %v2206 = vunpack.c.l.b16 %v2100
        %v2207 = vunpack.c.l.b16 %v2101
        %v2208 = vunpack.c.l.b16 %v2102
        %v2209 = vpack.c.b16 %v2200, %v2199
        %v2210 = vpack.c.b16 %v2202, %v2201
        %v2211 = vpack.c.b16 %v2204, %v2203
        %v2212 = vpack.c.b16 %v2206, %v2205
        %v2213 = vpack.c.b16 %v2208, %v2207
        %v2220 = vsel %vm1336, %v2090, 0
        %2222 = vmatprep.subr.bf16.mxu0 0
        %2223 = vmatpush1.bf16.msra.mxu0 %v2209
        %2224 = vmatprep.subr.bf16.mxu0 0
        %2225 = vmatpush1.bf16.msra.mxu0 %v2210
        %2226 = vmatprep.subr.bf16.mxu0 0
        %2227 = vmatpush1.bf16.msra.mxu0 %v2211
        %2228 = vmatprep.subr.bf16.mxu0 0
        %2229 = vmatpush1.bf16.msra.mxu0 %v2212
        %2230 = vmatprep.subr.bf16.mxu0 0
        %2231 = vmatpush1.bf16.msra.mxu0 %v2213
        %2232 = vmatprep.subr.bf16.mxu0 0
        %2233 = vmatpush1.bf16.msra.mxu0 0
        %2234 = vmatprep.subr.bf16.mxu0 0
        %2235 = vmatpush1.bf16.msra.mxu0 0
        %2236 = vmatprep.subr.bf16.mxu0 0
        %2237 = vmatpush1.bf16.msra.mxu0 0
        %2238 = vmatprep.subr.bf16.mxu0 0
        %2239 = vmatpush1.bf16.msra.mxu0 0
        %2240 = vmatprep.subr.bf16.mxu0 0
        %2241 = vmatpush1.bf16.msra.mxu0 0
        %2242 = vmatprep.subr.bf16.mxu0 0
        %2243 = vmatpush1.bf16.msra.mxu0 0
        %2244 = vmatprep.subr.bf16.mxu0 0
        %2245 = vmatpush1.bf16.msra.mxu0 0
        %2246 = vmatprep.subr.bf16.mxu0 0
        %2247 = vmatpush1.bf16.msra.mxu0 0
        %2248 = vmatprep.subr.bf16.mxu0 0
        %2249 = vmatpush1.bf16.msra.mxu0 0
        %2250 = vmatprep.subr.bf16.mxu0 0
        %2251 = vmatpush1.bf16.msra.mxu0 0
        %2252 = vmatprep.subr.bf16.mxu0 0
        %2253 = vmatpush1.bf16.msra.mxu0 0
        %2254 = vmatprep.mubr.bf16.mxu0 0
        %2255 = vmatmul.mubr.bf16.gmra.mrb[0].mxu0 %v2220
        %v2256 = vpop.f32.mrb[0].mxu0
        %v2257 = vadd.f32 %v2184, %v2256
        %v2258 = vpop.f32.mrb[0].mxu0
        %v2259 = vpop.f32.mrb[0].mxu0
        %v2260 = vpop.f32.mrb[0].mxu0
        %2261 = vdwg.mxu0
        %s2262 = scalar_lea.vmem %s5, 80
        %v2263 = vld [vmem:[%s2262] sm:$0xf]
        %v2264 = vld [vmem:[%s2262 + $0x4] sm:$0xf]
        %v2265 = vld [vmem:[%s2262 + $0x8] sm:$0xf]
        %v2266 = vld [vmem:[%s2262 + $0xc] sm:$0xf]
        %v2267 = vld [vmem:[%s2262 + $0x10] sm:$0xf]
        %v2268 = vld [vmem:[%s2262 + $0x14] sm:$0xf]
        %v2269 = vld [vmem:[%s2262 + $0x18] sm:$0xf]
        %v2270 = vld [vmem:[%s2262 + $0x1c] sm:$0xf]
        %v2271 = vld [vmem:[%s2262 + $0x20] sm:$0xf]
        %v2272 = vld [vmem:[%s2262 + $0x24] sm:$0xf]
        %v2283 = vunpack.c.l.b16 %v2263
        %v2284 = vunpack.c.l.b16 %v2264
        %v2285 = vunpack.c.l.b16 %v2265
        %v2286 = vunpack.c.l.b16 %v2266
        %v2287 = vunpack.c.l.b16 %v2267
        %v2288 = vunpack.c.l.b16 %v2268
        %v2289 = vunpack.c.l.b16 %v2269
        %v2290 = vunpack.c.l.b16 %v2270
        %v2291 = vunpack.c.l.b16 %v2271
        %v2292 = vunpack.c.l.b16 %v2272
        %v2293 = vpack.c.b16 %v2284, %v2283
        %v2294 = vpack.c.b16 %v2286, %v2285
        %v2295 = vpack.c.b16 %v2288, %v2287
        %v2296 = vpack.c.b16 %v2290, %v2289
        %v2297 = vpack.c.b16 %v2292, %v2291
        %v2304 = vsel %vm1336, %v2091, 0
        %2306 = vmatprep.subr.bf16.mxu0 0
        %2307 = vmatpush1.bf16.msra.mxu0 %v2293
        %2308 = vmatprep.subr.bf16.mxu0 0
        %2309 = vmatpush1.bf16.msra.mxu0 %v2294
        %2310 = vmatprep.subr.bf16.mxu0 0
        %2311 = vmatpush1.bf16.msra.mxu0 %v2295
        %2312 = vmatprep.subr.bf16.mxu0 0
        %2313 = vmatpush1.bf16.msra.mxu0 %v2296
        %2314 = vmatprep.subr.bf16.mxu0 0
        %2315 = vmatpush1.bf16.msra.mxu0 %v2297
        %2316 = vmatprep.subr.bf16.mxu0 0
        %2317 = vmatpush1.bf16.msra.mxu0 0
        %2318 = vmatprep.subr.bf16.mxu0 0
        %2319 = vmatpush1.bf16.msra.mxu0 0
        %2320 = vmatprep.subr.bf16.mxu0 0
        %2321 = vmatpush1.bf16.msra.mxu0 0
        %2322 = vmatprep.subr.bf16.mxu0 0
        %2323 = vmatpush1.bf16.msra.mxu0 0
        %2324 = vmatprep.subr.bf16.mxu0 0
        %2325 = vmatpush1.bf16.msra.mxu0 0
        %2326 = vmatprep.subr.bf16.mxu0 0
        %2327 = vmatpush1.bf16.msra.mxu0 0
        %2328 = vmatprep.subr.bf16.mxu0 0
        %2329 = vmatpush1.bf16.msra.mxu0 0
        %2330 = vmatprep.subr.bf16.mxu0 0
        %2331 = vmatpush1.bf16.msra.mxu0 0
        %2332 = vmatprep.subr.bf16.mxu0 0
        %2333 = vmatpush1.bf16.msra.mxu0 0
        %2334 = vmatprep.subr.bf16.mxu0 0
        %2335 = vmatpush1.bf16.msra.mxu0 0
        %2336 = vmatprep.subr.bf16.mxu0 0
        %2337 = vmatpush1.bf16.msra.mxu0 0
        %2338 = vmatprep.mubr.bf16.mxu0 0
        %2339 = vmatmul.mubr.bf16.gmra.mrb[0].mxu0 %v2304
        %v2340 = vpop.f32.mrb[0].mxu0
        %v2341 = vadd.f32 0.0, %v2340
        %v2342 = vpop.f32.mrb[0].mxu0
        %v2343 = vpop.f32.mrb[0].mxu0
        %v2344 = vpop.f32.mrb[0].mxu0
        %2345 = vdwg.mxu0
        %v2346 = vadd.f32 %v2257, %v2341
        %s2347 = scalar_lea.vmem %s5, 120
        %v2348 = vld [vmem:[%s2347] sm:$0xf]
        %v2349 = vld [vmem:[%s2347 + $0x4] sm:$0xf]
        %v2350 = vld [vmem:[%s2347 + $0x8] sm:$0xf]
        %v2351 = vld [vmem:[%s2347 + $0xc] sm:$0xf]
        %v2352 = vld [vmem:[%s2347 + $0x10] sm:$0xf]
        %v2353 = vld [vmem:[%s2347 + $0x14] sm:$0xf]
        %v2354 = vld [vmem:[%s2347 + $0x18] sm:$0xf]
        %v2355 = vld [vmem:[%s2347 + $0x1c] sm:$0xf]
        %v2356 = vld [vmem:[%s2347 + $0x20] sm:$0xf]
        %v2357 = vld [vmem:[%s2347 + $0x24] sm:$0xf]
        %v2359 = vrot.slane %v2091, 4
        %v2370 = vunpack.c.l.b16 %v2348
        %v2371 = vunpack.c.l.b16 %v2349
        %v2372 = vunpack.c.l.b16 %v2350
        %v2373 = vunpack.c.l.b16 %v2351
        %v2374 = vunpack.c.l.b16 %v2352
        %v2375 = vunpack.c.l.b16 %v2353
        %v2376 = vunpack.c.l.b16 %v2354
        %v2377 = vunpack.c.l.b16 %v2355
        %v2378 = vunpack.c.l.b16 %v2356
        %v2379 = vunpack.c.l.b16 %v2357
        %v2380 = vpack.c.b16 %v2371, %v2370
        %v2381 = vpack.c.b16 %v2373, %v2372
        %v2382 = vpack.c.b16 %v2375, %v2374
        %v2383 = vpack.c.b16 %v2377, %v2376
        %v2384 = vpack.c.b16 %v2379, %v2378
        %v2391 = vsel %vm1336, %v2359, 0
        %2393 = vmatprep.subr.bf16.mxu0 0
        %2394 = vmatpush1.bf16.msra.mxu0 %v2380
        %2395 = vmatprep.subr.bf16.mxu0 0
        %2396 = vmatpush1.bf16.msra.mxu0 %v2381
        %2397 = vmatprep.subr.bf16.mxu0 0
        %2398 = vmatpush1.bf16.msra.mxu0 %v2382
        %2399 = vmatprep.subr.bf16.mxu0 0
        %2400 = vmatpush1.bf16.msra.mxu0 %v2383
        %2401 = vmatprep.subr.bf16.mxu0 0
        %2402 = vmatpush1.bf16.msra.mxu0 %v2384
        %2403 = vmatprep.subr.bf16.mxu0 0
        %2404 = vmatpush1.bf16.msra.mxu0 0
        %2405 = vmatprep.subr.bf16.mxu0 0
        %2406 = vmatpush1.bf16.msra.mxu0 0
        %2407 = vmatprep.subr.bf16.mxu0 0
        %2408 = vmatpush1.bf16.msra.mxu0 0
        %2409 = vmatprep.subr.bf16.mxu0 0
        %2410 = vmatpush1.bf16.msra.mxu0 0
        %2411 = vmatprep.subr.bf16.mxu0 0
        %2412 = vmatpush1.bf16.msra.mxu0 0
        %2413 = vmatprep.subr.bf16.mxu0 0
        %2414 = vmatpush1.bf16.msra.mxu0 0
        %2415 = vmatprep.subr.bf16.mxu0 0
        %2416 = vmatpush1.bf16.msra.mxu0 0
        %2417 = vmatprep.subr.bf16.mxu0 0
        %2418 = vmatpush1.bf16.msra.mxu0 0
        %2419 = vmatprep.subr.bf16.mxu0 0
        %2420 = vmatpush1.bf16.msra.mxu0 0
        %2421 = vmatprep.subr.bf16.mxu0 0
        %2422 = vmatpush1.bf16.msra.mxu0 0
        %2423 = vmatprep.subr.bf16.mxu0 0
        %2424 = vmatpush1.bf16.msra.mxu0 0
        %2425 = vmatprep.mubr.bf16.mxu0 0
        %2426 = vmatmul.mubr.bf16.gmra.mrb[0].mxu0 %v2391
        %v2427 = vpop.f32.mrb[0].mxu0
        %v2428 = vadd.f32 0.0, %v2427
        %v2429 = vpop.f32.mrb[0].mxu0
        %v2430 = vpop.f32.mrb[0].mxu0
        %v2431 = vpop.f32.mrb[0].mxu0
        %2432 = vdwg.mxu0
        %v2433 = vadd.f32 %v2346, %v2428
        %s2434 = scalar_lea.vmem %s5, 160
        %v2435 = vld [vmem:[%s2434] sm:$0xf]
        %v2436 = vld [vmem:[%s2434 + $0x4] sm:$0xf]
        %v2437 = vld [vmem:[%s2434 + $0x8] sm:$0xf]
        %v2438 = vld [vmem:[%s2434 + $0xc] sm:$0xf]
        %v2439 = vld [vmem:[%s2434 + $0x10] sm:$0xf]
        %v2440 = vld [vmem:[%s2434 + $0x14] sm:$0xf]
        %v2441 = vld [vmem:[%s2434 + $0x18] sm:$0xf]
        %v2442 = vld [vmem:[%s2434 + $0x1c] sm:$0xf]
        %v2443 = vld [vmem:[%s2434 + $0x20] sm:$0xf]
        %v2444 = vld [vmem:[%s2434 + $0x24] sm:$0xf]
        %v2455 = vunpack.c.l.b16 %v2435
        %v2456 = vunpack.c.l.b16 %v2436
        %v2457 = vunpack.c.l.b16 %v2437
        %v2458 = vunpack.c.l.b16 %v2438
        %v2459 = vunpack.c.l.b16 %v2439
        %v2460 = vunpack.c.l.b16 %v2440
        %v2461 = vunpack.c.l.b16 %v2441
        %v2462 = vunpack.c.l.b16 %v2442
        %v2463 = vunpack.c.l.b16 %v2443
        %v2464 = vunpack.c.l.b16 %v2444
        %v2465 = vpack.c.b16 %v2456, %v2455
        %v2466 = vpack.c.b16 %v2458, %v2457
        %v2467 = vpack.c.b16 %v2460, %v2459
        %v2468 = vpack.c.b16 %v2462, %v2461
        %v2469 = vpack.c.b16 %v2464, %v2463
        %v2476 = vsel %vm1336, %v2092, 0
        %2478 = vmatprep.subr.bf16.mxu0 0
        %2479 = vmatpush1.bf16.msra.mxu0 %v2465
        %2480 = vmatprep.subr.bf16.mxu0 0
        %2481 = vmatpush1.bf16.msra.mxu0 %v2466
        %2482 = vmatprep.subr.bf16.mxu0 0
        %2483 = vmatpush1.bf16.msra.mxu0 %v2467
        %2484 = vmatprep.subr.bf16.mxu0 0
        %2485 = vmatpush1.bf16.msra.mxu0 %v2468
        %2486 = vmatprep.subr.bf16.mxu0 0
        %2487 = vmatpush1.bf16.msra.mxu0 %v2469
        %2488 = vmatprep.subr.bf16.mxu0 0
        %2489 = vmatpush1.bf16.msra.mxu0 0
        %2490 = vmatprep.subr.bf16.mxu0 0
        %2491 = vmatpush1.bf16.msra.mxu0 0
        %2492 = vmatprep.subr.bf16.mxu0 0
        %2493 = vmatpush1.bf16.msra.mxu0 0
        %2494 = vmatprep.subr.bf16.mxu0 0
        %2495 = vmatpush1.bf16.msra.mxu0 0
        %2496 = vmatprep.subr.bf16.mxu0 0
        %2497 = vmatpush1.bf16.msra.mxu0 0
        %2498 = vmatprep.subr.bf16.mxu0 0
        %2499 = vmatpush1.bf16.msra.mxu0 0
        %2500 = vmatprep.subr.bf16.mxu0 0
        %2501 = vmatpush1.bf16.msra.mxu0 0
        %2502 = vmatprep.subr.bf16.mxu0 0
        %2503 = vmatpush1.bf16.msra.mxu0 0
        %2504 = vmatprep.subr.bf16.mxu0 0
        %2505 = vmatpush1.bf16.msra.mxu0 0
        %2506 = vmatprep.subr.bf16.mxu0 0
        %2507 = vmatpush1.bf16.msra.mxu0 0
        %2508 = vmatprep.subr.bf16.mxu0 0
        %2509 = vmatpush1.bf16.msra.mxu0 0
        %2510 = vmatprep.mubr.bf16.mxu0 0
        %2511 = vmatmul.mubr.bf16.gmra.mrb[0].mxu0 %v2476
        %v2512 = vpop.f32.mrb[0].mxu0
        %v2513 = vadd.f32 0.0, %v2512
        %v2514 = vpop.f32.mrb[0].mxu0
        %v2515 = vpop.f32.mrb[0].mxu0
        %v2516 = vpop.f32.mrb[0].mxu0
        %2517 = vdwg.mxu0
        %v2518 = vadd.f32 %v2433, %v2513
        %v2519 = vld [vmem:[%s6] sm:$0x1]
        %v2521 = vlaneseq
        %v2522 = vshrl.u32 %v2521, 7
        %v2523 = vsub.s32 0, %v2522
        %v2524 = vrot.slane %v2519, %v2523
        %v2526 = vadd.f32 %v2518, %v2524
        %v2527 = vmax.f32 %v2526, 0.0
        %v2528 = vpack.c.bf16 %v2527, %v2527
        %v2529 = vld [vmem:[%s7] sm:$0xf]
        %v2530 = vld [vmem:[%s7 + $0x4] sm:$0xf]
        %v2531 = vld [vmem:[%s7 + $0x8] sm:$0xf]
        %v2532 = vld [vmem:[%s7 + $0xc] sm:$0xf]
        %v2533 = vld [vmem:[%s7 + $0x10] sm:$0xf]
        %v2534 = vld [vmem:[%s7 + $0x14] sm:$0xf]
        %v2535 = vld [vmem:[%s7 + $0x18] sm:$0xf]
        %v2536 = vld [vmem:[%s7 + $0x1c] sm:$0xf]
        %v2537 = vld [vmem:[%s7 + $0x20] sm:$0xf]
        %v2538 = vld [vmem:[%s7 + $0x24] sm:$0xf]
        %v2539 = vld [vmem:[%s7 + $0x28] sm:$0xf]
        %v2540 = vld [vmem:[%s7 + $0x2c] sm:$0xf]
        %v2541 = vld [vmem:[%s7 + $0x30] sm:$0xf]
        %v2542 = vld [vmem:[%s7 + $0x34] sm:$0xf]
        %v2543 = vld [vmem:[%s7 + $0x38] sm:$0xf]
        %v2544 = vld [vmem:[%s7 + $0x3c] sm:$0xf]
        %v2545 = vld [vmem:[%s8] sm:$0x1]
        %v2547 = vlaneseq
        %v2548 = vshrl.u32 %v2547, 7
        %v2549 = vsub.s32 0, %v2548
        %v2550 = vrot.slane %v2545, %v2549
        %v2568 = vunpack.c.l.b16 %v2529
        %v2569 = vunpack.c.l.b16 %v2530
        %v2570 = vunpack.c.l.b16 %v2531
        %v2571 = vunpack.c.l.b16 %v2532
        %v2572 = vunpack.c.l.b16 %v2533
        %v2573 = vunpack.c.l.b16 %v2534
        %v2574 = vunpack.c.l.b16 %v2535
        %v2575 = vunpack.c.l.b16 %v2536
        %v2576 = vunpack.c.l.b16 %v2537
        %v2577 = vunpack.c.l.b16 %v2538
        %v2578 = vunpack.c.l.b16 %v2539
        %v2579 = vunpack.c.l.b16 %v2540
        %v2580 = vunpack.c.l.b16 %v2541
        %v2581 = vunpack.c.l.b16 %v2542
        %v2582 = vunpack.c.l.b16 %v2543
        %v2583 = vunpack.c.l.b16 %v2544
        %v2584 = vpack.c.b16 %v2569, %v2568
        %v2585 = vpack.c.b16 %v2571, %v2570
        %v2586 = vpack.c.b16 %v2573, %v2572
        %v2587 = vpack.c.b16 %v2575, %v2574
        %v2588 = vpack.c.b16 %v2577, %v2576
        %v2589 = vpack.c.b16 %v2579, %v2578
        %v2590 = vpack.c.b16 %v2581, %v2580
        %v2591 = vpack.c.b16 %v2583, %v2582
        %2600 = vmatprep.subr.bf16.mxu0 0
        %2601 = vmatpush1.bf16.msra.mxu0 %v2584
        %2602 = vmatprep.subr.bf16.mxu0 0
        %2603 = vmatpush1.bf16.msra.mxu0 %v2585
        %2604 = vmatprep.subr.bf16.mxu0 0
        %2605 = vmatpush1.bf16.msra.mxu0 %v2586
        %2606 = vmatprep.subr.bf16.mxu0 0
        %2607 = vmatpush1.bf16.msra.mxu0 %v2587
        %2608 = vmatprep.subr.bf16.mxu0 0
        %2609 = vmatpush1.bf16.msra.mxu0 %v2588
        %2610 = vmatprep.subr.bf16.mxu0 0
        %2611 = vmatpush1.bf16.msra.mxu0 %v2589
        %2612 = vmatprep.subr.bf16.mxu0 0
        %2613 = vmatpush1.bf16.msra.mxu0 %v2590
        %2614 = vmatprep.subr.bf16.mxu0 0
        %2615 = vmatpush1.bf16.msra.mxu0 %v2591
        %2616 = vmatprep.subr.bf16.mxu0 0
        %2617 = vmatpush1.bf16.msra.mxu0 0
        %2618 = vmatprep.subr.bf16.mxu0 0
        %2619 = vmatpush1.bf16.msra.mxu0 0
        %2620 = vmatprep.subr.bf16.mxu0 0
        %2621 = vmatpush1.bf16.msra.mxu0 0
        %2622 = vmatprep.subr.bf16.mxu0 0
        %2623 = vmatpush1.bf16.msra.mxu0 0
        %2624 = vmatprep.subr.bf16.mxu0 0
        %2625 = vmatpush1.bf16.msra.mxu0 0
        %2626 = vmatprep.subr.bf16.mxu0 0
        %2627 = vmatpush1.bf16.msra.mxu0 0
        %2628 = vmatprep.subr.bf16.mxu0 0
        %2629 = vmatpush1.bf16.msra.mxu0 0
        %2630 = vmatprep.subr.bf16.mxu0 0
        %2631 = vmatpush1.bf16.msra.mxu0 0
        %2632 = vmatprep.mubr.bf16.mxu0 0
        %2633 = vmatmul.mubr.bf16.gmra.mrb[0].mxu0 %v2528
        %v2634 = vpop.f32.mrb[0].mxu0
        %v2635 = vadd.f32 %v2550, %v2634
        %v2636 = vpop.f32.mrb[0].mxu0
        %v2637 = vpop.f32.mrb[0].mxu0
        %v2638 = vpop.f32.mrb[0].mxu0
        %2639 = vdwg.mxu0
        %v2640 = vmax.f32 %v2635, 0.0
        %v2641 = vpack.c.bf16 %v2640, %v2640
        %v2642 = vld [vmem:[%s9] sm:$0xf]
        %v2643 = vld [vmem:[%s9 + $0x4] sm:$0xf]
        %v2644 = vld [vmem:[%s9 + $0x8] sm:$0xf]
        %v2645 = vld [vmem:[%s9 + $0xc] sm:$0xf]
        %v2646 = vld [vmem:[%s9 + $0x10] sm:$0xf]
        %v2647 = vld [vmem:[%s9 + $0x14] sm:$0xf]
        %v2648 = vld [vmem:[%s9 + $0x18] sm:$0xf]
        %v2649 = vld [vmem:[%s9 + $0x1c] sm:$0xf]
        %v2650 = vld [vmem:[%s9 + $0x20] sm:$0xf]
        %v2651 = vld [vmem:[%s9 + $0x24] sm:$0xf]
        %v2652 = vld [vmem:[%s9 + $0x28] sm:$0xf]
        %v2653 = vld [vmem:[%s9 + $0x2c] sm:$0xf]
        %v2654 = vld [vmem:[%s9 + $0x30] sm:$0xf]
        %v2655 = vld [vmem:[%s9 + $0x34] sm:$0xf]
        %v2656 = vld [vmem:[%s9 + $0x38] sm:$0xf]
        %v2657 = vld [vmem:[%s9 + $0x3c] sm:$0xf]
        %v2658 = vld [vmem:[%s10] sm:$0x1]
        %v2660 = vlaneseq
        %v2661 = vshrl.u32 %v2660, 7
        %v2662 = vsub.s32 0, %v2661
        %v2663 = vrot.slane %v2658, %v2662
        %v2681 = vunpack.c.l.b16 %v2642
        %v2682 = vunpack.c.l.b16 %v2643
        %v2683 = vunpack.c.l.b16 %v2644
        %v2684 = vunpack.c.l.b16 %v2645
        %v2685 = vunpack.c.l.b16 %v2646
        %v2686 = vunpack.c.l.b16 %v2647
        %v2687 = vunpack.c.l.b16 %v2648
        %v2688 = vunpack.c.l.b16 %v2649
        %v2689 = vunpack.c.l.b16 %v2650
        %v2690 = vunpack.c.l.b16 %v2651
        %v2691 = vunpack.c.l.b16 %v2652
        %v2692 = vunpack.c.l.b16 %v2653
        %v2693 = vunpack.c.l.b16 %v2654
        %v2694 = vunpack.c.l.b16 %v2655
        %v2695 = vunpack.c.l.b16 %v2656
        %v2696 = vunpack.c.l.b16 %v2657
        %v2697 = vpack.c.b16 %v2682, %v2681
        %v2698 = vpack.c.b16 %v2684, %v2683
        %v2699 = vpack.c.b16 %v2686, %v2685
        %v2700 = vpack.c.b16 %v2688, %v2687
        %v2701 = vpack.c.b16 %v2690, %v2689
        %v2702 = vpack.c.b16 %v2692, %v2691
        %v2703 = vpack.c.b16 %v2694, %v2693
        %v2704 = vpack.c.b16 %v2696, %v2695
        %2713 = vmatprep.subr.bf16.mxu0 0
        %2714 = vmatpush1.bf16.msra.mxu0 %v2697
        %2715 = vmatprep.subr.bf16.mxu0 0
        %2716 = vmatpush1.bf16.msra.mxu0 %v2698
        %2717 = vmatprep.subr.bf16.mxu0 0
        %2718 = vmatpush1.bf16.msra.mxu0 %v2699
        %2719 = vmatprep.subr.bf16.mxu0 0
        %2720 = vmatpush1.bf16.msra.mxu0 %v2700
        %2721 = vmatprep.subr.bf16.mxu0 0
        %2722 = vmatpush1.bf16.msra.mxu0 %v2701
        %2723 = vmatprep.subr.bf16.mxu0 0
        %2724 = vmatpush1.bf16.msra.mxu0 %v2702
        %2725 = vmatprep.subr.bf16.mxu0 0
        %2726 = vmatpush1.bf16.msra.mxu0 %v2703
        %2727 = vmatprep.subr.bf16.mxu0 0
        %2728 = vmatpush1.bf16.msra.mxu0 %v2704
        %2729 = vmatprep.subr.bf16.mxu0 0
        %2730 = vmatpush1.bf16.msra.mxu0 0
        %2731 = vmatprep.subr.bf16.mxu0 0
        %2732 = vmatpush1.bf16.msra.mxu0 0
        %2733 = vmatprep.subr.bf16.mxu0 0
        %2734 = vmatpush1.bf16.msra.mxu0 0
        %2735 = vmatprep.subr.bf16.mxu0 0
        %2736 = vmatpush1.bf16.msra.mxu0 0
        %2737 = vmatprep.subr.bf16.mxu0 0
        %2738 = vmatpush1.bf16.msra.mxu0 0
        %2739 = vmatprep.subr.bf16.mxu0 0
        %2740 = vmatpush1.bf16.msra.mxu0 0
        %2741 = vmatprep.subr.bf16.mxu0 0
        %2742 = vmatpush1.bf16.msra.mxu0 0
        %2743 = vmatprep.subr.bf16.mxu0 0
        %2744 = vmatpush1.bf16.msra.mxu0 0
        %2745 = vmatprep.mubr.bf16.mxu0 0
        %2746 = vmatmul.mubr.bf16.gmra.mrb[0].mxu0 %v2641
        %v2747 = vpop.f32.mrb[0].mxu0
        %v2748 = vadd.f32 %v2663, %v2747
        %v2749 = vpop.f32.mrb[0].mxu0
        %v2750 = vpop.f32.mrb[0].mxu0
        %v2751 = vpop.f32.mrb[0].mxu0
        %2752 = vdwg.mxu0
        %2753 = vmax.xlane.f32.xlu0 %v2748
        %v2754 = vpop.xlane.xlu0 %2753
        %v2755 = vsub.f32 %v2748, %v2754
        %v2756 = vmul.f32 %v2755, 1.442695
        %v2757 = vpow.pop %v2756
        %2758 = vadd.xlane.f32.xlu0 %v2757
        %v2759 = vpop.xlane.xlu0 %2758
        %v2760 = vrcp.pop %v2759
        %v2761 = vmul.f32 %v2757, %v2760
        %2762 = vst [vmem:[%s380] sm:$0xff] %v2761
        %s2763 = sand.u32 %s269, 1
        %s2764 = scalar_lea.sflag [#allocation3], %s2763
        %s2765 = sand.u32 %s269, 1
        %s2766 = smul.addr %s2765, 8
        %s2767 = scalar_lea.vmem [#allocation2], %s2766
        // Predicated region
        $region65: #{cnn_forward.1} parent=63 // pred_check
          %p2768 = pneg %p279
        $region66: #{cnn_forward.1} parent=63 // pred_check_branch
          %2770 = sbr.rel (%p2768) target = $region68
        $region67: #{cnn_forward.1} parent=63 // pred_region
          %s2772 = ssub.s32 128, 128
          %2773 = vsyncadd %s2764, %s2772
          %s2774 = smul.addr %s25, 128
          %s2775 = scalar_lea.hbm %s11, %s2774
          %s2777 = sshll.u32 %s2767, 4
          %s2778 = int_to_ptr.vmem [resolvable:$true] %s2777
          %2780 = dma.vmem_to_hbm [thread:$0]  %s2778, 128, %s2775, %s2764
        $region68: #{cnn_forward.1} parent=63 // pred_fallthru
          _
      $region64: #{cnn_forward.1} parent=5 // pred_fallthru
        _
      %p2781 = scmp.le.s32.totalorder 2, %s20
      // Predicated region
      $region69: #{cnn_forward.1} parent=5 // pred_check
        %p2782 = pneg %p2781
      $region70: #{cnn_forward.1} parent=5 // pred_check_branch
        %2784 = sbr.rel (%p2782) target = $region72
      $region71: #{cnn_forward.1} parent=5 // pred_region
        %s2785 = ssub.s32 %s20, 2
        // Predicated region
        $region73: #{cnn_forward.1} parent=71 // pred_check
          %p2786 = pneg %p285
        $region74: #{cnn_forward.1} parent=71 // pred_check_branch
          %2788 = sbr.rel (%p2786) target = $region76
        $region75: #{cnn_forward.1} parent=71 // pred_region
          %s2789 = sand.u32 %s270, 1
          %s2790 = scalar_lea.sflag [#allocation3], %s2789
          %s2791 = sand.u32 %s270, 1
          %s2792 = smul.addr %s2791, 8
          %s2793 = scalar_lea.vmem [#allocation2], %s2792
          %2794 = dma.done %s2790, 128
        $region76: #{cnn_forward.1} parent=71 // pred_fallthru
          _
      $region72: #{cnn_forward.1} parent=5 // pred_fallthru
        _
    $region6: #{cnn_forward.1} parent=1 // loop_footer
      %s24 = sadd.s32 1, %s20
    $region7: #{cnn_forward.1} parent=1 // loop_footer_branch
      %19 = sbr.rel target = $region3
    $region8: #{cnn_forward.1} parent=1 // loop_exit
      _
    %2795 = vsyncpa [#allocation3], 1
    %s2796 = scalar_lea.sflag [#allocation3], 1
    %2797 = vsyncpa %s2796, 1

</llo_original>
